<compile_context>
chip_gen: v7x
topology: tpu7x:2x2x1
jax: 0.10.0
libtpu: 0.0.40
codegen_flags: <defaults>
</compile_context>

<pallas_src>
import jax
import jax.numpy as jnp
from jax import lax
from jax.experimental import pallas as pl
from jax.experimental.pallas import tpu as pltpu

EPS = 1e-5
LANE = 128                   # TPU lane width: channel dims are padded up to this
MXU_DTYPE = jnp.bfloat16     # matmul operand dtype (accumulation stays f32)


def _round_up(x, m):
    return ((x + m - 1) // m) * m


def _tpu_vmem_bytes():
    try:
        return int(pltpu.get_tpu_info().vmem_capacity_bytes)
    except Exception:
        return 128 * 1024 * 1024   # v5e/v6e default if the query is unavailable


def _compiler_params(dim_sem, block_bytes):
    # Generation-aware scoped-VMEM limit: half the physical capacity (~32 MiB on
    # v7x, 64 MiB on v5e/v6e), never below a 16 MiB floor, never above the cap.
    cap = max(_tpu_vmem_bytes() // 2, 16 * 1024 * 1024)
    limit = int(min(max(block_bytes, 16 * 1024 * 1024), cap))
    return pltpu.CompilerParams(dimension_semantics=dim_sem,
                                vmem_limit_bytes=limit)


def _pick_tile_h(h, w, cin_p, cout_p, n, budget):
    """Largest H-divisor whose per-step footprint fits the VMEM budget, while
    keeping >= 4 grid steps so both v7x TensorCores stay busy and the pipeline
    has depth."""
    wp = w + 2

    def fits(th):
        px = th * w
        patch = 2 * px * 9 * cin_p * 2                       # im2col pieces + patch (bf16)
        acc = px * cout_p * 4                                 # f32 accumulator
        rows = (th + 2) * wp * cin_p * 2                      # halo-joined input copy
        io = 2 * (th * wp * cin_p * 2 + 2 * wp * cin_p * 2    # double-buffered blocks
                  + 9 * cin_p * cout_p * 2
                  + px * cout_p * 2 + 2 * cout_p * 4)
        return patch + acc + rows + io <= budget

    divisors = [d for d in range(1, h + 1) if h % d == 0]
    ok = [d for d in divisors if fits(d)] or [1]
    best = max(ok)
    pref = [d for d in ok if n * (h // d) >= 4]
    if pref:
        best = max(pref)
    elif n == 1:
        pref2 = [d for d in ok if (h // d) >= 2]
        if pref2:
            best = max(pref2)
    return best


def _build_halo(x, tile_h):
    """x: (N, H, Wp, C). Returns (N, gh, 2, Wp, C): the row just above and just
    below each H-row tile; zero rows at the image border supply the 'same'
    padding along H. Only 2 rows per tile are materialized (vs 3 full copies
    of the input in v2)."""
    n, h, wp, c = x.shape
    gh = h // tile_h
    zero = jnp.zeros((n, 1, wp, c), x.dtype)
    if gh == 1:
        above = zero
        below = zero
    else:
        above = jnp.concatenate([zero, x[:, tile_h - 1:h - 1:tile_h]], axis=1)
        below = jnp.concatenate([x[:, tile_h::tile_h], zero], axis=1)
    return jnp.stack([above, below], axis=2)


# --------------------------------------------------------------------------
# Kernel 1: 3x3 "same" conv (one im2col matmul) + fused BN-stats epilogue.
# --------------------------------------------------------------------------
def _conv3x3_stats_kernel(x_ref, halo_ref, w_ref, out_ref, sum_ref, sq_ref):
    # x_ref    : (1, TH, W+2, Cin)   row tile, W already "same"-padded (bf16)
    # halo_ref : (1, 1, 2, W+2, Cin) row above / row below the tile (zeros at edge)
    # w_ref    : (9*Cin, Cout)       im2col-flattened HWIO weights (bf16)
    # out_ref  : (1, TH, W, Cout)    raw conv output (bf16)
    # sum/sq   : (1, 1, 1, Cout)     per-tile per-channel sum / sum-of-squares (f32)
    _, th, wp, cin = x_ref.shape
    w = wp - 2
    cout = w_ref.shape[1]

    hal = halo_ref[...].reshape(2, wp, cin)
    rows = jnp.concatenate(
        [hal[0:1], x_ref[...].reshape(th, wp, cin), hal[1:2]], axis=0)  # (TH+2, W+2, Cin)

    # im2col along K: the 9 taps concatenated on the lane axis -> one MXU matmul
    # with K = 9*Cin instead of nine K = Cin matmuls.
    # TODO(synk): stream K over ky (or roll-after-matmul) if a bundle dump shows
    # the vector-store slot binding on the patch build.
    pieces = []
    for ky in range(3):
        sl = rows[ky:ky + th]                       # (TH, W+2, Cin)
        for kx in range(3):
            pieces.append(sl[:, kx:kx + w, :])      # (TH, W, Cin)
    patch = jnp.concatenate(pieces, axis=-1).reshape(th * w, 9 * cin)

    acc = jnp.dot(patch, w_ref[...], preferred_element_type=jnp.float32)

    out_ref[...] = acc.reshape(1, th, w, cout).astype(out_ref.dtype)   # bf16 store
    # Fused BN statistics epilogue (mean/var finished across tiles outside).
    sum_ref[...] = jnp.sum(acc, axis=0).reshape(1, 1, 1, cout)
    sq_ref[...] = jnp.sum(acc * acc, axis=0).reshape(1, 1, 1, cout)


def _conv3x3_stats(x, halo, w_flat, tile_h):
    """x: (N, H, W+2, Cin) bf16 (W-padded, lane-padded channels);
    halo: (N, gh, 2, W+2, Cin) bf16. Returns raw conv (N,H,W,Cout) bf16 plus
    per-channel sum / sumsq over (N,H,W) in f32."""
    n, h, wp, cin = x.shape
    w = wp - 2
    cout = w_flat.shape[1]
    gh = h // tile_h

    in_bytes = (tile_h * wp * cin + 2 * wp * cin + 9 * cin * cout) * 2
    out_bytes = tile_h * w * cout * 2 + 2 * cout * 4
    tmp_bytes = ((tile_h + 2) * wp * cin * 2
                 + 2 * tile_h * w * 9 * cin * 2
                 + tile_h * w * cout * 4)
    params = _compiler_params(("parallel", "parallel"),
                              2 * (in_bytes + out_bytes) + tmp_bytes)

    raw, psum, psq = pl.pallas_call(
        _conv3x3_stats_kernel,
        grid=(n, gh),
        in_specs=[pl.BlockSpec((1, tile_h, wp, cin), lambda b, i: (b, i, 0, 0)),
                  pl.BlockSpec((1, 1, 2, wp, cin), lambda b, i: (b, i, 0, 0, 0)),
                  pl.BlockSpec((9 * cin, cout), lambda b, i: (0, 0))],
        out_specs=(pl.BlockSpec((1, tile_h, w, cout), lambda b, i: (b, i, 0, 0)),
                   pl.BlockSpec((1, 1, 1, cout), lambda b, i: (b, i, 0, 0)),
                   pl.BlockSpec((1, 1, 1, cout), lambda b, i: (b, i, 0, 0))),
        out_shape=(jax.ShapeDtypeStruct((n, h, w, cout), MXU_DTYPE),
                   jax.ShapeDtypeStruct((n, gh, 1, cout), jnp.float32),
                   jax.ShapeDtypeStruct((n, gh, 1, cout), jnp.float32)),
        compiler_params=params,
    )(x, halo, w_flat)

    return raw, jnp.sum(psum, axis=(0, 1, 2)), jnp.sum(psq, axis=(0, 1, 2))


def _bn_affine(csum, csq, count, gamma, beta):
    """Fold train-mode BatchNorm into per-channel y = x*scale + shift (f32)."""
    mean = csum / count
    var = jnp.maximum(csq / count - mean * mean, 0.0)   # E[x^2]-E[x]^2, clamped
    inv = lax.rsqrt(var + EPS)
    scale = gamma * inv
    shift = beta - mean * scale
    return (scale.reshape(1, -1).astype(jnp.float32),
            shift.reshape(1, -1).astype(jnp.float32))


# --------------------------------------------------------------------------
# Kernel 2: BN1 + ReLU, tiled over rows, written into a W-padded bf16 buffer.
# --------------------------------------------------------------------------
def _bn_relu_wpad_kernel(x_ref, scale_ref, shift_ref, o_ref):
    _, th, w, c = x_ref.shape
    s = scale_ref[...].reshape(1, 1, 1, c)
    t = shift_ref[...].reshape(1, 1, 1, c)
    y = jnp.maximum(x_ref[...].astype(jnp.float32) * s + t, 0.0).astype(o_ref.dtype)
    zcol = jnp.zeros((1, th, 1, c), o_ref.dtype)
    o_ref[:, :, 0:1, :] = zcol
    o_ref[:, :, w + 1:w + 2, :] = zcol
    o_ref[:, :, 1:w + 1, :] = y


def _bn_relu_wpad(raw, scale, shift, tile_h):
    n, h, w, c = raw.shape
    gh = h // tile_h
    block_bytes = 2 * (tile_h * w * c * 2 + 2 * c * 4
                       + tile_h * (w + 2) * c * 2) + tile_h * w * c * 4
    return pl.pallas_call(
        _bn_relu_wpad_kernel,
        grid=(n, gh),
        in_specs=[pl.BlockSpec((1, tile_h, w, c), lambda b, i: (b, i, 0, 0)),
                  pl.BlockSpec((1, c), lambda b, i: (0, 0)),
                  pl.BlockSpec((1, c), lambda b, i: (0, 0))],
        out_specs=pl.BlockSpec((1, tile_h, w + 2, c), lambda b, i: (b, i, 0, 0)),
        out_shape=jax.ShapeDtypeStruct((n, h, w + 2, c), MXU_DTYPE),
        compiler_params=_compiler_params(("parallel", "parallel"), block_bytes),
    )(raw, scale, shift)


# --------------------------------------------------------------------------
# Kernel 3: final BN + ReLU, emitting lane-dense NCHW blocks directly.
# --------------------------------------------------------------------------
def _bn_relu_nchw_kernel(x_ref, scale_ref, shift_ref, o_ref):
    _, th, w, c = x_ref.shape
    cout = o_ref.shape[1]
    x2 = x_ref[...].reshape(th * w, c).astype(jnp.float32)
    y = jnp.maximum(x2 * scale_ref[...] + shift_ref[...], 0.0)   # (th*w, C_p)
    # 128x128-tile transpose to channel-major, then keep the true channels.
    o_ref[...] = y.T[:cout].reshape(1, cout, th * w)


def _bn_relu_nhwc_kernel(x_ref, scale_ref, shift_ref, o_ref):
    c = x_ref.shape[-1]
    cout = o_ref.shape[-1]
    s = scale_ref[...].reshape(1, 1, 1, c)
    t = shift_ref[...].reshape(1, 1, 1, c)
    y = jnp.maximum(x_ref[...].astype(jnp.float32) * s + t, 0.0)
    o_ref[...] = y[..., :cout]


def _bn_relu_out(raw, scale, shift, tile_h, cout):
    n, h, w, c = raw.shape
    gh = h // tile_h
    in_bytes = tile_h * w * c * 2 + 2 * c * 4

    if (tile_h * w) % LANE == 0:
        # NCHW written straight from the kernel; the final reshape below is a
        # free metadata op (row-major contiguous split of the minor dim).
        out_bytes = cout * tile_h * w * 4
        params = _compiler_params(("parallel", "parallel"),
                                  2 * (in_bytes + out_bytes) + 2 * tile_h * w * c * 4)
        out3 = pl.pallas_call(
            _bn_relu_nchw_kernel,
            grid=(n, gh),
            in_specs=[pl.BlockSpec((1, tile_h, w, c), lambda b, i: (b, i, 0, 0)),
                      pl.BlockSpec((1, c), lambda b, i: (0, 0)),
                      pl.BlockSpec((1, c), lambda b, i: (0, 0))],
            out_specs=pl.BlockSpec((1, cout, tile_h * w), lambda b, i: (b, 0, i)),
            out_shape=jax.ShapeDtypeStruct((n, cout, h * w), jnp.float32),
            compiler_params=params,
        )(raw, scale, shift)
        return out3.reshape(n, cout, h, w)

    # Fallback for shapes where tile_h*W is not lane-aligned: NHWC out + one
    # XLA transpose in the wrapper.
    out_bytes = tile_h * w * cout * 4
    params = _compiler_params(("parallel", "parallel"),
                              2 * (in_bytes + out_bytes) + tile_h * w * c * 4)
    out = pl.pallas_call(
        _bn_relu_nhwc_kernel,
        grid=(n, gh),
        in_specs=[pl.BlockSpec((1, tile_h, w, c), lambda b, i: (b, i, 0, 0)),
                  pl.BlockSpec((1, c), lambda b, i: (0, 0)),
                  pl.BlockSpec((1, c), lambda b, i: (0, 0))],
        out_specs=pl.BlockSpec((1, tile_h, w, cout), lambda b, i: (b, i, 0, 0)),
        out_shape=jax.ShapeDtypeStruct((n, h, w, cout), jnp.float32),
        compiler_params=params,
    )(raw, scale, shift)
    return jnp.transpose(out, (0, 3, 1, 2))


def _prep_weight(w_oihw, cin_p, cout_p):
    """OIHW torch weight -> lane-padded, im2col-flattened (9*Cin_p, Cout_p) bf16."""
    co, ci, kh, kw = w_oihw.shape
    w_hwio = jnp.transpose(w_oihw.astype(jnp.float32), (2, 3, 1, 0))  # (3,3,Ci,Co)
    w_hwio = jnp.pad(w_hwio, ((0, 0), (0, 0), (0, cin_p - ci), (0, cout_p - co)))
    return w_hwio.reshape(kh * kw * cin_p, cout_p).astype(MXU_DTYPE)


def double_conv(x_nchw, w1_oihw, g1, b1, w2_oihw, g2, b2, *, tile_h=None):
    """Pallas DoubleConv.  x_nchw: (N, Cin, H, W) f32 -> (N, Cout, H, W) f32.

    BatchNorm uses training-mode batch statistics (behaviour of a freshly
    constructed nn.BatchNorm2d); matmuls use bf16 operands / f32 accumulation.
    """
    n, cin, h, w = x_nchw.shape
    cmid = w1_oihw.shape[0]
    cout = w2_oihw.shape[0]
    cin_p, cmid_p, cout_p = (_round_up(c, LANE) for c in (cin, cmid, cout))

    if tile_h is None:
        budget = int(0.75 * (_tpu_vmem_bytes() // 2))
        tile_h = _pick_tile_h(h, w, max(cin_p, cmid_p), max(cmid_p, cout_p), n, budget)
    while h % tile_h:
        tile_h -= 1

    # glue: NCHW -> NHWC (channels on the lane axis), channel pad to a multiple
    # of 128, "same" pad along W only (H padding is supplied by the halo arrays).
    # TODO(synk): an NHWC end-to-end model would avoid this transpose entirely.
    x_nhwc = jnp.transpose(x_nchw, (0, 2, 3, 1)).astype(jnp.float32)
    x_prep = jnp.pad(x_nhwc, ((0, 0), (0, 0), (1, 1), (0, cin_p - cin))).astype(MXU_DTYPE)

    w1_f = _prep_weight(w1_oihw, cin_p, cmid_p)
    w2_f = _prep_weight(w2_oihw, cmid_p, cout_p)
    g1p = jnp.pad(g1.astype(jnp.float32), (0, cmid_p - cmid))
    b1p = jnp.pad(b1.astype(jnp.float32), (0, cmid_p - cmid))
    g2p = jnp.pad(g2.astype(jnp.float32), (0, cout_p - cout))
    b2p = jnp.pad(b2.astype(jnp.float32), (0, cout_p - cout))
    count = float(n * h * w)

    # conv1 (+ fused BN stats) -> BN1+ReLU (tiled, W-padded bf16) -> conv2 -> BN2+ReLU.
    raw1, s1, q1 = _conv3x3_stats(x_prep, _build_halo(x_prep, tile_h), w1_f, tile_h)
    scale1, shift1 = _bn_affine(s1, q1, count, g1p, b1p)
    act1 = _bn_relu_wpad(raw1, scale1, shift1, tile_h)        # (N, H, W+2, Cmid_p) bf16
    # TODO(synk): fuse relu(x*scale1+shift1) into conv2's patch build to drop this
    # intermediate-activation round trip (needs in-kernel border masking).

    raw2, s2, q2 = _conv3x3_stats(act1, _build_halo(act1, tile_h), w2_f, tile_h)
    scale2, shift2 = _bn_affine(s2, q2, count, g2p, b2p)
    return _bn_relu_out(raw2, scale2, shift2, tile_h, cout)


def _reference(x_nchw, w1, g1, b1, w2, g2, b2):
    """Pure-JAX f32 reference mirroring PyTorch (train-mode BN)."""
    def conv(x, w):
        return lax.conv_general_dilated(
            x, w, window_strides=(1, 1), padding=((1, 1), (1, 1)),
            dimension_numbers=("NCHW", "OIHW", "NCHW"))

    def bn_relu(x, g, b):
        mean = jnp.mean(x, axis=(0, 2, 3), keepdims=True)
        var = jnp.mean((x - mean) ** 2, axis=(0, 2, 3), keepdims=True)
        y = (x - mean) * lax.rsqrt(var + EPS)
        y = y * g.reshape(1, -1, 1, 1) + b.reshape(1, -1, 1, 1)
        return jnp.maximum(y, 0.0)

    return bn_relu(conv(bn_relu(conv(x_nchw, w1), g1, b1), w2), g2, b2)


if __name__ == "__main__":
    N, Cin, Cmid, Cout, H, W = 2, 4, 8, 8, 16, 16

    key = jax.random.PRNGKey(0)
    k1, k2, k3 = jax.random.split(key, 3)
    x = jax.random.normal(k1, (N, Cin, H, W), dtype=jnp.float32)
    w1 = jax.random.normal(k2, (Cmid, Cin, 3, 3), dtype=jnp.float32) * 0.1
    w2 = jax.random.normal(k3, (Cout, Cmid, 3, 3), dtype=jnp.float32) * 0.1
    g1 = jnp.ones((Cmid,), jnp.float32)    # BatchNorm2d default weight = 1
    b1 = jnp.zeros((Cmid,), jnp.float32)   # BatchNorm2d default bias   = 0
    g2 = jnp.ones((Cout,), jnp.float32)
    b2 = jnp.zeros((Cout,), jnp.float32)

    run = jax.jit(double_conv)   # tile_h auto-picked -> 8 (grid (2, 2) per kernel)
    out = jax.block_until_ready(run(x, w1, g1, b1, w2, g2, b2))

    ref = _reference(x, w1, g1, b1, w2, g2, b2)
    assert out.shape == (N, Cout, H, W)
    # bf16 MXU operands (f32 accumulation) vs. the f32 reference: allow small noise.
    max_err = float(jnp.max(jnp.abs(out - ref)))
    assert jnp.allclose(out, ref, atol=5e-2, rtol=5e-2), max_err

    print("KERNEL_OK")
</pallas_src>

<mosaic_0001>
module attributes {stable_mosaic.version = 11 : i64} {
  func.func @_conv3x3_stats_kernel(%arg0: i32, %arg1: i32, %arg2: memref<1x8x18x128xbf16, #tpu.memory_space<vmem>>, %arg3: memref<1x1x2x18x128xbf16, #tpu.memory_space<vmem>>, %arg4: memref<1152x128xbf16, #tpu.memory_space<vmem>>, %arg5: memref<1x8x16x128xbf16, #tpu.memory_space<vmem>>, %arg6: memref<1x1x1x128xf32, #tpu.memory_space<vmem>>, %arg7: memref<1x1x1x128xf32, #tpu.memory_space<vmem>>) attributes {dimension_semantics = [#tpu.dimension_semantics<parallel>, #tpu.dimension_semantics<parallel>], iteration_bounds = array<i64: 2, 2>, scalar_prefetch = 0 : i64, scratch_operands = 0 : i64, tpu.core_type = #tpu.core_type<tc>, window_params = [{transform_indices = @transform_0, window_bounds = array<i64: 1, 8, 18, 128>}, {transform_indices = @transform_1, window_bounds = array<i64: 1, 1, 2, 18, 128>}, {pipeline_mode = #tpu.pipeline_mode<synchronous>, transform_indices = @transform_2, window_bounds = array<i64: 1152, 128>}, {transform_indices = @transform_3, window_bounds = array<i64: 1, 8, 16, 128>}, {transform_indices = @transform_4, window_bounds = array<i64: 1, 1, 1, 128>}, {transform_indices = @transform_5, window_bounds = array<i64: 1, 1, 1, 128>}]} {
    %c0 = arith.constant 0 : index
    %c0_0 = arith.constant 0 : index
    %c0_1 = arith.constant 0 : index
    %c0_2 = arith.constant 0 : index
    %c0_3 = arith.constant 0 : index
    %0 = vector.load %arg3[%c0, %c0_0, %c0_1, %c0_2, %c0_3] : memref<1x1x2x18x128xbf16, #tpu.memory_space<vmem>>, vector<1x1x2x18x128xbf16>
    %1 = vector.shape_cast %0 : vector<1x1x2x18x128xbf16> to vector<2x18x128xbf16>
    %2 = vector.extract_strided_slice %1 {offsets = [0, 0, 0], sizes = [1, 18, 128], strides = [1, 1, 1]} : vector<2x18x128xbf16> to vector<1x18x128xbf16>
    %c0_4 = arith.constant 0 : index
    %c0_5 = arith.constant 0 : index
    %c0_6 = arith.constant 0 : index
    %c0_7 = arith.constant 0 : index
    %3 = vector.load %arg2[%c0_4, %c0_5, %c0_6, %c0_7] : memref<1x8x18x128xbf16, #tpu.memory_space<vmem>>, vector<1x8x18x128xbf16>
    %4 = vector.shape_cast %3 : vector<1x8x18x128xbf16> to vector<8x18x128xbf16>
    %5 = vector.extract_strided_slice %1 {offsets = [1, 0, 0], sizes = [1, 18, 128], strides = [1, 1, 1]} : vector<2x18x128xbf16> to vector<1x18x128xbf16>
    %6 = tpu.concatenate %2, %4, %5 in 0 : vector<1x18x128xbf16>, vector<8x18x128xbf16>, vector<1x18x128xbf16> -> vector<10x18x128xbf16>
    %7 = vector.extract_strided_slice %6 {offsets = [0, 0, 0], sizes = [8, 18, 128], strides = [1, 1, 1]} : vector<10x18x128xbf16> to vector<8x18x128xbf16>
    %8 = vector.extract_strided_slice %7 {offsets = [0, 0, 0], sizes = [8, 16, 128], strides = [1, 1, 1]} : vector<8x18x128xbf16> to vector<8x16x128xbf16>
    %9 = vector.extract_strided_slice %7 {offsets = [0, 1, 0], sizes = [8, 16, 128], strides = [1, 1, 1]} : vector<8x18x128xbf16> to vector<8x16x128xbf16>
    %10 = vector.extract_strided_slice %7 {offsets = [0, 2, 0], sizes = [8, 16, 128], strides = [1, 1, 1]} : vector<8x18x128xbf16> to vector<8x16x128xbf16>
    %11 = vector.extract_strided_slice %6 {offsets = [1, 0, 0], sizes = [8, 18, 128], strides = [1, 1, 1]} : vector<10x18x128xbf16> to vector<8x18x128xbf16>
    %12 = vector.extract_strided_slice %11 {offsets = [0, 0, 0], sizes = [8, 16, 128], strides = [1, 1, 1]} : vector<8x18x128xbf16> to vector<8x16x128xbf16>
    %13 = vector.extract_strided_slice %11 {offsets = [0, 1, 0], sizes = [8, 16, 128], strides = [1, 1, 1]} : vector<8x18x128xbf16> to vector<8x16x128xbf16>
    %14 = vector.extract_strided_slice %11 {offsets = [0, 2, 0], sizes = [8, 16, 128], strides = [1, 1, 1]} : vector<8x18x128xbf16> to vector<8x16x128xbf16>
    %15 = vector.extract_strided_slice %6 {offsets = [2, 0, 0], sizes = [8, 18, 128], strides = [1, 1, 1]} : vector<10x18x128xbf16> to vector<8x18x128xbf16>
    %16 = vector.extract_strided_slice %15 {offsets = [0, 0, 0], sizes = [8, 16, 128], strides = [1, 1, 1]} : vector<8x18x128xbf16> to vector<8x16x128xbf16>
    %17 = vector.extract_strided_slice %15 {offsets = [0, 1, 0], sizes = [8, 16, 128], strides = [1, 1, 1]} : vector<8x18x128xbf16> to vector<8x16x128xbf16>
    %18 = vector.extract_strided_slice %15 {offsets = [0, 2, 0], sizes = [8, 16, 128], strides = [1, 1, 1]} : vector<8x18x128xbf16> to vector<8x16x128xbf16>
    %19 = tpu.concatenate %8, %9, %10, %12, %13, %14, %16, %17, %18 in 2 : vector<8x16x128xbf16>, vector<8x16x128xbf16>, vector<8x16x128xbf16>, vector<8x16x128xbf16>, vector<8x16x128xbf16>, vector<8x16x128xbf16>, vector<8x16x128xbf16>, vector<8x16x128xbf16>, vector<8x16x128xbf16> -> vector<8x16x1152xbf16>
    %20 = vector.shape_cast %19 : vector<8x16x1152xbf16> to vector<128x1152xbf16>
    %c0_8 = arith.constant 0 : index
    %c0_9 = arith.constant 0 : index
    %21 = vector.load %arg4[%c0_8, %c0_9] : memref<1152x128xbf16, #tpu.memory_space<vmem>>, vector<1152x128xbf16>
    %cst = arith.constant dense<0.000000e+00> : vector<128x128xf32>
    %22 = tpu.matmul %20, %21, %cst {dimension_numbers = #tpu.dot_dimension_numbers<[1], [0], [0], [1], [0, 0, 1, 1], [], []>} : vector<128x1152xbf16>, vector<1152x128xbf16>, vector<128x128xf32> -> vector<128x128xf32>
    %23 = vector.shape_cast %22 : vector<128x128xf32> to vector<1x8x16x128xf32>
    %24 = arith.truncf %23 : vector<1x8x16x128xf32> to vector<1x8x16x128xbf16>
    %c0_10 = arith.constant 0 : index
    %c0_11 = arith.constant 0 : index
    %c0_12 = arith.constant 0 : index
    %c0_13 = arith.constant 0 : index
    %25 = vector.load %arg5[%c0_10, %c0_11, %c0_12, %c0_13] : memref<1x8x16x128xbf16, #tpu.memory_space<vmem>>, vector<1x8x16x128xbf16>
    tpu.vector_store %arg5[%c0_10, %c0_11, %c0_12, %c0_13], %24 {strides = array<i32>} : memref<1x8x16x128xbf16, #tpu.memory_space<vmem>>, vector<1x8x16x128xbf16>,
    %cst_14 = arith.constant dense<0.000000e+00> : vector<128xf32>
    %26 = vector.multi_reduction <add>, %22, %cst_14 [0] : vector<128x128xf32> to vector<128xf32>
    %27 = vector.shape_cast %26 : vector<128xf32> to vector<1x1x1x128xf32>
    %c0_15 = arith.constant 0 : index
    %c0_16 = arith.constant 0 : index
    %c0_17 = arith.constant 0 : index
    %c0_18 = arith.constant 0 : index
    %28 = vector.load %arg6[%c0_15, %c0_16, %c0_17, %c0_18] : memref<1x1x1x128xf32, #tpu.memory_space<vmem>>, vector<1x1x1x128xf32>
    tpu.vector_store %arg6[%c0_15, %c0_16, %c0_17, %c0_18], %27 {strides = array<i32>} : memref<1x1x1x128xf32, #tpu.memory_space<vmem>>, vector<1x1x1x128xf32>,
    %29 = arith.mulf %22, %22 : vector<128x128xf32>
    %cst_19 = arith.constant dense<0.000000e+00> : vector<128xf32>
    %30 = vector.multi_reduction <add>, %29, %cst_19 [0] : vector<128x128xf32> to vector<128xf32>
    %31 = vector.shape_cast %30 : vector<128xf32> to vector<1x1x1x128xf32>
    %c0_20 = arith.constant 0 : index
    %c0_21 = arith.constant 0 : index
    %c0_22 = arith.constant 0 : index
    %c0_23 = arith.constant 0 : index
    %32 = vector.load %arg7[%c0_20, %c0_21, %c0_22, %c0_23] : memref<1x1x1x128xf32, #tpu.memory_space<vmem>>, vector<1x1x1x128xf32>
    tpu.vector_store %arg7[%c0_20, %c0_21, %c0_22, %c0_23], %31 {strides = array<i32>} : memref<1x1x1x128xf32, #tpu.memory_space<vmem>>, vector<1x1x1x128xf32>,
    return
  }
  func.func @transform_0(%arg0: i32, %arg1: i32) -> (i32, i32, i32, i32) {
    %c0_i32 = arith.constant 0 : i32
    %c0_i32_0 = arith.constant 0 : i32
    %c0_i32_1 = arith.constant 0 : i32
    return %arg0, %arg1, %c0_i32, %c0_i32_0 : i32, i32, i32, i32
  }
  func.func @transform_1(%arg0: i32, %arg1: i32) -> (i32, i32, i32, i32, i32) {
    %c0_i32 = arith.constant 0 : i32
    %c0_i32_0 = arith.constant 0 : i32
    %c0_i32_1 = arith.constant 0 : i32
    %c0_i32_2 = arith.constant 0 : i32
    return %arg0, %arg1, %c0_i32, %c0_i32_0, %c0_i32_1 : i32, i32, i32, i32, i32
  }
  func.func @transform_2(%arg0: i32, %arg1: i32) -> (i32, i32) {
    %c0_i32 = arith.constant 0 : i32
    %c0_i32_0 = arith.constant 0 : i32
    %c0_i32_1 = arith.constant 0 : i32
    return %c0_i32, %c0_i32_0 : i32, i32
  }
  func.func @transform_3(%arg0: i32, %arg1: i32) -> (i32, i32, i32, i32) {
    %c0_i32 = arith.constant 0 : i32
    %c0_i32_0 = arith.constant 0 : i32
    %c0_i32_1 = arith.constant 0 : i32
    return %arg0, %arg1, %c0_i32, %c0_i32_0 : i32, i32, i32, i32
  }
  func.func @transform_4(%arg0: i32, %arg1: i32) -> (i32, i32, i32, i32) {
    %c0_i32 = arith.constant 0 : i32
    %c0_i32_0 = arith.constant 0 : i32
    %c0_i32_1 = arith.constant 0 : i32
    return %arg0, %arg1, %c0_i32, %c0_i32_0 : i32, i32, i32, i32
  }
  func.func @transform_5(%arg0: i32, %arg1: i32) -> (i32, i32, i32, i32) {
    %c0_i32 = arith.constant 0 : i32
    %c0_i32_0 = arith.constant 0 : i32
    %c0_i32_1 = arith.constant 0 : i32
    return %arg0, %arg1, %c0_i32, %c0_i32_0 : i32, i32, i32, i32
  }
}

module attributes {stable_mosaic.version = 11 : i64} {
  func.func @_bn_relu_wpad_kernel(%arg0: i32, %arg1: i32, %arg2: memref<1x8x16x128xbf16, #tpu.memory_space<vmem>>, %arg3: memref<1x128xf32, #tpu.memory_space<vmem>>, %arg4: memref<1x128xf32, #tpu.memory_space<vmem>>, %arg5: memref<1x8x18x128xbf16, #tpu.memory_space<vmem>>) attributes {dimension_semantics = [#tpu.dimension_semantics<parallel>, #tpu.dimension_semantics<parallel>], iteration_bounds = array<i64: 2, 2>, scalar_prefetch = 0 : i64, scratch_operands = 0 : i64, tpu.core_type = #tpu.core_type<tc>, window_params = [{transform_indices = @transform_0, window_bounds = array<i64: 1, 8, 16, 128>}, {pipeline_mode = #tpu.pipeline_mode<synchronous>, transform_indices = @transform_1, window_bounds = array<i64: 1, 128>}, {pipeline_mode = #tpu.pipeline_mode<synchronous>, transform_indices = @transform_2, window_bounds = array<i64: 1, 128>}, {transform_indices = @transform_3, window_bounds = array<i64: 1, 8, 18, 128>}]} {
    %c0 = arith.constant 0 : index
    %c0_0 = arith.constant 0 : index
    %0 = vector.load %arg3[%c0, %c0_0] : memref<1x128xf32, #tpu.memory_space<vmem>>, vector<1x128xf32>
    %1 = vector.shape_cast %0 : vector<1x128xf32> to vector<1x1x1x128xf32>
    %c0_1 = arith.constant 0 : index
    %c0_2 = arith.constant 0 : index
    %2 = vector.load %arg4[%c0_1, %c0_2] : memref<1x128xf32, #tpu.memory_space<vmem>>, vector<1x128xf32>
    %3 = vector.shape_cast %2 : vector<1x128xf32> to vector<1x1x1x128xf32>
    %c0_3 = arith.constant 0 : index
    %c0_4 = arith.constant 0 : index
    %c0_5 = arith.constant 0 : index
    %c0_6 = arith.constant 0 : index
    %4 = vector.load %arg2[%c0_3, %c0_4, %c0_5, %c0_6] : memref<1x8x16x128xbf16, #tpu.memory_space<vmem>>, vector<1x8x16x128xbf16>
    %5 = arith.extf %4 : vector<1x8x16x128xbf16> to vector<1x8x16x128xf32>
    %6 = vector.broadcast %1 : vector<1x1x1x128xf32> to vector<1x8x16x128xf32>
    %7 = arith.mulf %5, %6 : vector<1x8x16x128xf32>
    %8 = vector.broadcast %3 : vector<1x1x1x128xf32> to vector<1x8x16x128xf32>
    %9 = arith.addf %7, %8 : vector<1x8x16x128xf32>
    %cst = arith.constant 0.000000e+00 : f32
    %10 = vector.broadcast %cst : f32 to vector<1x8x16x128xf32>
    %11 = arith.maximumf %9, %10 : vector<1x8x16x128xf32>
    %12 = arith.truncf %11 : vector<1x8x16x128xf32> to vector<1x8x16x128xbf16>
    %cst_7 = arith.constant 0.000000e+00 : bf16
    %13 = vector.broadcast %cst_7 : bf16 to vector<1x8x1x128xbf16>
    %c0_8 = arith.constant 0 : index
    %c0_9 = arith.constant 0 : index
    %c0_10 = arith.constant 0 : index
    %c0_11 = arith.constant 0 : index
    %14 = vector.load %arg5[%c0_8, %c0_9, %c0_10, %c0_11] : memref<1x8x18x128xbf16, #tpu.memory_space<vmem>>, vector<1x8x1x128xbf16>
    tpu.vector_store %arg5[%c0_8, %c0_9, %c0_10, %c0_11], %13 {strides = array<i32>} : memref<1x8x18x128xbf16, #tpu.memory_space<vmem>>, vector<1x8x1x128xbf16>,
    %c0_12 = arith.constant 0 : index
    %c0_13 = arith.constant 0 : index
    %c17 = arith.constant 17 : index
    %c0_14 = arith.constant 0 : index
    %15 = vector.load %arg5[%c0_12, %c0_13, %c17, %c0_14] : memref<1x8x18x128xbf16, #tpu.memory_space<vmem>>, vector<1x8x1x128xbf16>
    tpu.vector_store %arg5[%c0_12, %c0_13, %c17, %c0_14], %13 {strides = array<i32>} : memref<1x8x18x128xbf16, #tpu.memory_space<vmem>>, vector<1x8x1x128xbf16>,
    %c0_15 = arith.constant 0 : index
    %c0_16 = arith.constant 0 : index
    %c1 = arith.constant 1 : index
    %c0_17 = arith.constant 0 : index
    %16 = vector.load %arg5[%c0_15, %c0_16, %c1, %c0_17] : memref<1x8x18x128xbf16, #tpu.memory_space<vmem>>, vector<1x8x16x128xbf16>
    tpu.vector_store %arg5[%c0_15, %c0_16, %c1, %c0_17], %12 {strides = array<i32>} : memref<1x8x18x128xbf16, #tpu.memory_space<vmem>>, vector<1x8x16x128xbf16>,
    return
  }
  func.func @transform_0(%arg0: i32, %arg1: i32) -> (i32, i32, i32, i32) {
    %c0_i32 = arith.constant 0 : i32
    %c0_i32_0 = arith.constant 0 : i32
    %c0_i32_1 = arith.constant 0 : i32
    return %arg0, %arg1, %c0_i32, %c0_i32_0 : i32, i32, i32, i32
  }
  func.func @transform_1(%arg0: i32, %arg1: i32) -> (i32, i32) {
    %c0_i32 = arith.constant 0 : i32
    %c0_i32_0 = arith.constant 0 : i32
    %c0_i32_1 = arith.constant 0 : i32
    return %c0_i32, %c0_i32_0 : i32, i32
  }
  func.func @transform_2(%arg0: i32, %arg1: i32) -> (i32, i32) {
    %c0_i32 = arith.constant 0 : i32
    %c0_i32_0 = arith.constant 0 : i32
    %c0_i32_1 = arith.constant 0 : i32
    return %c0_i32, %c0_i32_0 : i32, i32
  }
  func.func @transform_3(%arg0: i32, %arg1: i32) -> (i32, i32, i32, i32) {
    %c0_i32 = arith.constant 0 : i32
    %c0_i32_0 = arith.constant 0 : i32
    %c0_i32_1 = arith.constant 0 : i32
    return %arg0, %arg1, %c0_i32, %c0_i32_0 : i32, i32, i32, i32
  }
}

module attributes {stable_mosaic.version = 11 : i64} {
  func.func @_bn_relu_nchw_kernel(%arg0: i32, %arg1: i32, %arg2: memref<1x8x16x128xbf16, #tpu.memory_space<vmem>>, %arg3: memref<1x128xf32, #tpu.memory_space<vmem>>, %arg4: memref<1x128xf32, #tpu.memory_space<vmem>>, %arg5: memref<1x8x128xf32, #tpu.memory_space<vmem>>) attributes {dimension_semantics = [#tpu.dimension_semantics<parallel>, #tpu.dimension_semantics<parallel>], iteration_bounds = array<i64: 2, 2>, scalar_prefetch = 0 : i64, scratch_operands = 0 : i64, tpu.core_type = #tpu.core_type<tc>, window_params = [{transform_indices = @transform_0, window_bounds = array<i64: 1, 8, 16, 128>}, {pipeline_mode = #tpu.pipeline_mode<synchronous>, transform_indices = @transform_1, window_bounds = array<i64: 1, 128>}, {pipeline_mode = #tpu.pipeline_mode<synchronous>, transform_indices = @transform_2, window_bounds = array<i64: 1, 128>}, {transform_indices = @transform_3, window_bounds = array<i64: 1, 8, 128>}]} {
    %c0 = arith.constant 0 : index
    %c0_0 = arith.constant 0 : index
    %c0_1 = arith.constant 0 : index
    %c0_2 = arith.constant 0 : index
    %0 = vector.load %arg2[%c0, %c0_0, %c0_1, %c0_2] : memref<1x8x16x128xbf16, #tpu.memory_space<vmem>>, vector<1x8x16x128xbf16>
    %1 = vector.shape_cast %0 : vector<1x8x16x128xbf16> to vector<128x128xbf16>
    %2 = arith.extf %1 : vector<128x128xbf16> to vector<128x128xf32>
    %c0_3 = arith.constant 0 : index
    %c0_4 = arith.constant 0 : index
    %3 = vector.load %arg3[%c0_3, %c0_4] : memref<1x128xf32, #tpu.memory_space<vmem>>, vector<1x128xf32>
    %4 = vector.broadcast %3 : vector<1x128xf32> to vector<128x128xf32>
    %5 = arith.mulf %2, %4 : vector<128x128xf32>
    %c0_5 = arith.constant 0 : index
    %c0_6 = arith.constant 0 : index
    %6 = vector.load %arg4[%c0_5, %c0_6] : memref<1x128xf32, #tpu.memory_space<vmem>>, vector<1x128xf32>
    %7 = vector.broadcast %6 : vector<1x128xf32> to vector<128x128xf32>
    %8 = arith.addf %5, %7 : vector<128x128xf32>
    %cst = arith.constant 0.000000e+00 : f32
    %9 = vector.broadcast %cst : f32 to vector<128x128xf32>
    %10 = arith.maximumf %8, %9 : vector<128x128xf32>
    %11 = tpu.transpose %10, [1, 0] : vector<128x128xf32> -> vector<128x128xf32>
    %12 = vector.extract_strided_slice %11 {offsets = [0, 0], sizes = [8, 128], strides = [1, 1]} : vector<128x128xf32> to vector<8x128xf32>
    %13 = vector.shape_cast %12 : vector<8x128xf32> to vector<1x8x128xf32>
    %c0_7 = arith.constant 0 : index
    %c0_8 = arith.constant 0 : index
    %c0_9 = arith.constant 0 : index
    %14 = vector.load %arg5[%c0_7, %c0_8, %c0_9] : memref<1x8x128xf32, #tpu.memory_space<vmem>>, vector<1x8x128xf32>
    tpu.vector_store %arg5[%c0_7, %c0_8, %c0_9], %13 {strides = array<i32>} : memref<1x8x128xf32, #tpu.memory_space<vmem>>, vector<1x8x128xf32>,
    return
  }
  func.func @transform_0(%arg0: i32, %arg1: i32) -> (i32, i32, i32, i32) {
    %c0_i32 = arith.constant 0 : i32
    %c0_i32_0 = arith.constant 0 : i32
    %c0_i32_1 = arith.constant 0 : i32
    return %arg0, %arg1, %c0_i32, %c0_i32_0 : i32, i32, i32, i32
  }
  func.func @transform_1(%arg0: i32, %arg1: i32) -> (i32, i32) {
    %c0_i32 = arith.constant 0 : i32
    %c0_i32_0 = arith.constant 0 : i32
    %c0_i32_1 = arith.constant 0 : i32
    return %c0_i32, %c0_i32_0 : i32, i32
  }
  func.func @transform_2(%arg0: i32, %arg1: i32) -> (i32, i32) {
    %c0_i32 = arith.constant 0 : i32
    %c0_i32_0 = arith.constant 0 : i32
    %c0_i32_1 = arith.constant 0 : i32
    return %c0_i32, %c0_i32_0 : i32, i32
  }
  func.func @transform_3(%arg0: i32, %arg1: i32) -> (i32, i32, i32) {
    %c0_i32 = arith.constant 0 : i32
    %c0_i32_0 = arith.constant 0 : i32
    return %arg0, %c0_i32, %arg1 : i32, i32, i32
  }
}

</mosaic_0001>

<llo_original>
// kernel: double_conv.7
$region0: #{double_conv.7}
  #allocation0 [shape = 'u32[]', space=smem, size = 0x4, offset = 0x4, fixed_abs, tag = 'smem constant byte address 0x4 - core index']
  #allocation1 [shape = 'u32[144,128]{1,0:T(1,128)}', space=vmem, size = 0x12000, scoped, tag = 'internal scratch']
  %s0 = inlined_call_operand.vmem [shape: bf16[2,16,16,128], index: 0, kind: input, shape index: {}]
  %s1 = inlined_call_operand.vmem [shape: f32[1,128], index: 1, kind: input, shape index: {}]
  %s2 = inlined_call_operand.vmem [shape: f32[1,128], index: 2, kind: input, shape index: {}]
  %s3 = inlined_call_operand.vmem [shape: f32[2,8,256], index: 3, kind: output, shape index: {}]
  %s4 = sld [smem:[#allocation0]]
  $region45: #{double_conv.7} parent=0
    _
  %s6 = ssub.s32 1, %s4
  %s7 = scalar_select 0, %s6, %s4
  loop: start=0, step=1, limit=6
  $region2: #{double_conv.7} parent=0 // loop_pre_header
    _
  $region3: #{double_conv.7} parent=0 // loop_header
    %s9 = sphi 0, %s13
    %p10 = scmp.ge.s32.totalorder %s9, 6
    %s16 = sphi 0, %s28
    %s17 = sphi 0, %s24
    %s18 = sphi 0, %s16
    %s19 = sphi 0, %s17
    %s20 = sphi 0, %s18
    %s21 = sphi 0, %s19
    %s33 = sphi 0, %s35
    %s36 = sphi 0, %s33
    %s37 = sphi 0, %s36
    %s53 = sphi 0, %s37
    %s57 = sphi 0, %s57
    %s59 = sphi 0, %s57
    %s60 = sphi 0, %s59
    %s74 = sphi 0, %s60
    %s78 = sphi 0, %s78
    %s80 = sphi 0, %s78
    %s81 = sphi 0, %s80
    %s95 = sphi 0, %s81
    %s103 = sphi 0, %s105
    %s106 = sphi 0, %s103
    %s107 = sphi 0, %s106
    %s123 = sphi 0, %s107
  $region4: #{double_conv.7} parent=0 // loop_header_branch
    %12 = sbr.rel (%p10) target = $region8
  $region5: #{double_conv.7} parent=0 // loop_body
    %s14 = ssub.s32 %s9, 1
    %s15 = ssub.s32 %s9, 2
    %s22 = sadd.s32 1, %s17
    %p23 = scmp.ge.s32.totalorder %s22, 2
    %s24 = scalar_select %p23, 0, %s22
    %s25 = sadd.s32 1, %s16
    %s26 = scalar_select %p23, %s25, %s16
    %p27 = scmp.ge.s32.totalorder %s26, 2
    %s28 = scalar_select %p27, 0, %s26
    %s29 = ssub.s32 %s16, %s28
    %s30 = ssub.s32 %s17, %s24
    %s31 = sor.u32 %s29, %s30
    %p32 = scmp.eq.s32.totalorder %s31, 0
    %s34 = sadd.s32 %s33, 1
    %s35 = scalar_select %p32, %s33, %s34
    %p38 = pneg %p32
    %p39 = scmp.eq.s32.totalorder %s9, 3
    %p40 = por %p38, %p39
    %p41 = scmp.ne.s32.totalorder %s33, %s36
    %p42 = scmp.eq.s32.totalorder %s9, 0
    %p43 = por %p41, %p42
    %p44 = scmp.ne.s32.totalorder %s33, %s36
    %p45 = scmp.eq.s32.totalorder %s14, 3
    %p46 = por %p44, %p45
    %p47 = scmp.ne.s32.totalorder %s36, %s37
    %p48 = scmp.eq.s32.totalorder %s14, 0
    %p49 = por %p47, %p48
    %p50 = scmp.ne.s32.totalorder %s36, %s37
    %p51 = scmp.eq.s32.totalorder %s15, 3
    %p52 = por %p50, %p51
    %p54 = scmp.ne.s32.totalorder %s37, %s53
    %p55 = scmp.eq.s32.totalorder %s15, 0
    %p56 = por %p54, %p55
    %s58 = sadd.s32 %s57, 1
    %p61 = scmp.eq.s32.totalorder %s9, 3
    %p62 = scmp.ne.s32.totalorder %s57, %s59
    %p63 = scmp.eq.s32.totalorder %s9, 0
    %p64 = por %p62, %p63
    %p65 = scmp.ne.s32.totalorder %s57, %s59
    %p66 = scmp.eq.s32.totalorder %s14, 3
    %p67 = por %p65, %p66
    %p68 = scmp.ne.s32.totalorder %s59, %s60
    %p69 = scmp.eq.s32.totalorder %s14, 0
    %p70 = por %p68, %p69
    %p71 = scmp.ne.s32.totalorder %s59, %s60
    %p72 = scmp.eq.s32.totalorder %s15, 3
    %p73 = por %p71, %p72
    %p75 = scmp.ne.s32.totalorder %s60, %s74
    %p76 = scmp.eq.s32.totalorder %s15, 0
    %p77 = por %p75, %p76
    %s79 = sadd.s32 %s78, 1
    %p82 = scmp.eq.s32.totalorder %s9, 3
    %p83 = scmp.ne.s32.totalorder %s78, %s80
    %p84 = scmp.eq.s32.totalorder %s9, 0
    %p85 = por %p83, %p84
    %p86 = scmp.ne.s32.totalorder %s78, %s80
    %p87 = scmp.eq.s32.totalorder %s14, 3
    %p88 = por %p86, %p87
    %p89 = scmp.ne.s32.totalorder %s80, %s81
    %p90 = scmp.eq.s32.totalorder %s14, 0
    %p91 = por %p89, %p90
    %p92 = scmp.ne.s32.totalorder %s80, %s81
    %p93 = scmp.eq.s32.totalorder %s15, 3
    %p94 = por %p92, %p93
    %p96 = scmp.ne.s32.totalorder %s81, %s95
    %p97 = scmp.eq.s32.totalorder %s15, 0
    %p98 = por %p96, %p97
    %s99 = ssub.s32 %s16, %s28
    %s100 = ssub.s32 %s17, %s24
    %s101 = sor.u32 %s99, %s100
    %p102 = scmp.eq.s32.totalorder %s101, 0
    %s104 = sadd.s32 %s103, 1
    %s105 = scalar_select %p102, %s103, %s104
    %p108 = pneg %p102
    %p109 = scmp.eq.s32.totalorder %s9, 3
    %p110 = por %p108, %p109
    %p111 = scmp.ne.s32.totalorder %s103, %s106
    %p112 = scmp.eq.s32.totalorder %s9, 0
    %p113 = por %p111, %p112
    %p114 = scmp.ne.s32.totalorder %s103, %s106
    %p115 = scmp.eq.s32.totalorder %s14, 3
    %p116 = por %p114, %p115
    %p117 = scmp.ne.s32.totalorder %s106, %s107
    %p118 = scmp.eq.s32.totalorder %s14, 0
    %p119 = por %p117, %p118
    %p120 = scmp.ne.s32.totalorder %s106, %s107
    %p121 = scmp.eq.s32.totalorder %s15, 3
    %p122 = por %p120, %p121
    %p124 = scmp.ne.s32.totalorder %s107, %s123
    %p125 = scmp.eq.s32.totalorder %s15, 0
    %p126 = por %p124, %p125
    %p127 = scmp.le.s32.totalorder 1, %s9
    %p128 = scmp.lt.s32.totalorder %s9, 5
    %p129 = pnand %p127, %p128
    %p130 = pneg %p129
    // Predicated region
    $region9: #{double_conv.7} parent=5 // pred_check
      _
    $region10: #{double_conv.7} parent=5 // pred_check_branch
      %132 = sbr.rel (%p129) target = $region12
    $region11: #{double_conv.7} parent=5 // pred_region
      %s133 = ssub.s32 %s9, 1
      // Predicated region
      $region13: #{double_conv.7} parent=11 // pred_check
        %p134 = pneg %p70
      $region14: #{double_conv.7} parent=11 // pred_check_branch
        %136 = sbr.rel (%p134) target = $region16
      $region15: #{double_conv.7} parent=11 // pred_region
        _
      $region16: #{double_conv.7} parent=11 // pred_fallthru
        _
      // Predicated region
      $region17: #{double_conv.7} parent=11 // pred_check
        %p137 = pneg %p91
      $region18: #{double_conv.7} parent=11 // pred_check_branch
        %139 = sbr.rel (%p137) target = $region20
      $region19: #{double_conv.7} parent=11 // pred_region
        _
      $region20: #{double_conv.7} parent=11 // pred_fallthru
        _
    $region12: #{double_conv.7} parent=5 // pred_fallthru
      _
    %p140 = scmp.lt.s32.totalorder %s9, 4
    // Predicated region
    $region21: #{double_conv.7} parent=5 // pred_check
      %p141 = pneg %p140
    $region22: #{double_conv.7} parent=5 // pred_check_branch
      %143 = sbr.rel (%p141) target = $region24
    $region23: #{double_conv.7} parent=5 // pred_region
      // Predicated region
      $region25: #{double_conv.7} parent=23 // pred_check
        %p144 = pneg %p43
      $region26: #{double_conv.7} parent=23 // pred_check_branch
        %146 = sbr.rel (%p144) target = $region28
      $region27: #{double_conv.7} parent=23 // pred_region
        %s147 = smul.u32 8, %s17
        %p148 = scmp.lt.s32.totalorder %s16, 1
        %s149 = scalar_select %p148, %s16, 1
        %p150 = scmp.lt.s32.totalorder %s147, 15
        %s151 = scalar_select %p150, %s147, 15
        %s152 = smul.addr %s151, 2
        %s153 = smul.addr %s149, 32
        %s154 = sadd.s32 %s152, %s153
        %s155 = smul.addr %s154, 4
        %s156 = scalar_lea.vmem %s0, %s155
        %s157 = smul.u32 8, %s17
      $region28: #{double_conv.7} parent=23 // pred_fallthru
        _
    $region24: #{double_conv.7} parent=5 // pred_fallthru
      _
    %p158 = scmp.le.s32.totalorder 1, %s9
    %p159 = scmp.lt.s32.totalorder %s9, 5
    %p160 = pnand %p158, %p159
    %p161 = pneg %p160
    // Predicated region
    $region29: #{double_conv.7} parent=5 // pred_check
      _
    $region30: #{double_conv.7} parent=5 // pred_check_branch
      %163 = sbr.rel (%p160) target = $region32
    $region31: #{double_conv.7} parent=5 // pred_region
      %s164 = ssub.s32 %s9, 1
      %s165 = smul.u32 8, %s19
      %p166 = scmp.lt.s32.totalorder %s18, 1
      %s167 = scalar_select %p166, %s18, 1
      %p168 = scmp.lt.s32.totalorder %s165, 15
      %s169 = scalar_select %p168, %s165, 15
      %s170 = smul.addr %s169, 2
      %s171 = smul.addr %s167, 32
      %s172 = sadd.s32 %s170, %s171
      %s173 = smul.addr %s172, 4
      %s174 = scalar_lea.vmem %s0, %s173
      %p175 = pneg %p49
      %p176 = pneg %p46
      %p177 = pneg %p70
      %p178 = pneg %p67
      %p179 = pneg %p91
      %p180 = pneg %p88
      %p181 = pneg %p119
      %p182 = pneg %p116
      %p183 = scmp.lt.s32.totalorder %s18, 1
      %s184 = scalar_select %p183, %s18, 1
      %p185 = scmp.lt.s32.totalorder %s19, 1
      %s186 = scalar_select %p185, %s19, 1
      %s187 = smul.addr %s184, 2
      %s188 = sadd.s32 %s186, %s187
      %s189 = smul.addr %s188, 8
      %s190 = scalar_lea.vmem %s3, %s189
      %s191 = smul.u32 8, %s19
      %p192 = scmp.lt.s32.totalorder %s18, 1
      %s193 = scalar_select %p192, %s18, 1
      %p194 = scmp.lt.s32.totalorder %s191, 15
      %s195 = scalar_select %p194, %s191, 15
      %s196 = smul.addr %s195, 2
      %s197 = smul.addr %s193, 32
      %s198 = sadd.s32 %s196, %s197
      %s199 = smul.addr %s198, 4
      %s200 = scalar_lea.vmem %s0, %s199
      %s201 = smul.u32 8, %s19
      %p202 = scmp.lt.s32.totalorder %s18, 1
      %s203 = scalar_select %p202, %s18, 1
      %p204 = scmp.lt.s32.totalorder %s19, 1
      %s205 = scalar_select %p204, %s19, 1
      %s206 = smul.addr %s203, 2
      %s207 = sadd.s32 %s205, %s206
      %s208 = smul.addr %s207, 8
      %s209 = scalar_lea.vmem %s3, %s208
      %v210 = vld [vmem:[%s200] sm:$0xf]
      %v211 = vld [vmem:[%s200 + $0x4] sm:$0xf]
      %v212 = vld [vmem:[%s200 + $0x8] sm:$0xf]
      %v213 = vld [vmem:[%s200 + $0xc] sm:$0xf]
      %v214 = vld [vmem:[%s200 + $0x10] sm:$0xf]
      %v215 = vld [vmem:[%s200 + $0x14] sm:$0xf]
      %v216 = vld [vmem:[%s200 + $0x18] sm:$0xf]
      %v217 = vld [vmem:[%s200 + $0x1c] sm:$0xf]
      %v218 = vld [vmem:[%s200 + $0x20] sm:$0xf]
      %v219 = vld [vmem:[%s200 + $0x24] sm:$0xf]
      %v220 = vld [vmem:[%s200 + $0x28] sm:$0xf]
      %v221 = vld [vmem:[%s200 + $0x2c] sm:$0xf]
      %v222 = vld [vmem:[%s200 + $0x30] sm:$0xf]
      %v223 = vld [vmem:[%s200 + $0x34] sm:$0xf]
      %v224 = vld [vmem:[%s200 + $0x38] sm:$0xf]
      %v225 = vld [vmem:[%s200 + $0x3c] sm:$0xf]
      %v226 = vunpack.c.l.bf16 %v210
      %v227 = vunpack.c.l.bf16 %v211
      %v228 = vunpack.c.l.bf16 %v212
      %v229 = vunpack.c.l.bf16 %v213
      %v230 = vunpack.c.l.bf16 %v214
      %v231 = vunpack.c.l.bf16 %v215
      %v232 = vunpack.c.l.bf16 %v216
      %v233 = vunpack.c.l.bf16 %v217
      %v234 = vunpack.c.l.bf16 %v218
      %v235 = vunpack.c.l.bf16 %v219
      %v236 = vunpack.c.l.bf16 %v220
      %v237 = vunpack.c.l.bf16 %v221
      %v238 = vunpack.c.l.bf16 %v222
      %v239 = vunpack.c.l.bf16 %v223
      %v240 = vunpack.c.l.bf16 %v224
      %v241 = vunpack.c.l.bf16 %v225
      %v242 = vld [vmem:[%s1] sm:$0x1]
      %v244 = vlaneseq
      %v245 = vshrl.u32 %v244, 7
      %v246 = vsub.s32 0, %v245
      %v247 = vrot.slane %v242, %v246
      %v249 = vmul.f32 %v226, %v247
      %v250 = vmul.f32 %v227, %v247
      %v251 = vmul.f32 %v228, %v247
      %v252 = vmul.f32 %v229, %v247
      %v253 = vmul.f32 %v230, %v247
      %v254 = vmul.f32 %v231, %v247
      %v255 = vmul.f32 %v232, %v247
      %v256 = vmul.f32 %v233, %v247
      %v257 = vmul.f32 %v234, %v247
      %v258 = vmul.f32 %v235, %v247
      %v259 = vmul.f32 %v236, %v247
      %v260 = vmul.f32 %v237, %v247
      %v261 = vmul.f32 %v238, %v247
      %v262 = vmul.f32 %v239, %v247
      %v263 = vmul.f32 %v240, %v247
      %v264 = vmul.f32 %v241, %v247
      %v265 = vld [vmem:[%s2] sm:$0x1]
      %v267 = vlaneseq
      %v268 = vshrl.u32 %v267, 7
      %v269 = vsub.s32 0, %v268
      %v270 = vrot.slane %v265, %v269
      %v272 = vadd.f32 %v249, %v270
      %v273 = vadd.f32 %v250, %v270
      %v274 = vadd.f32 %v251, %v270
      %v275 = vadd.f32 %v252, %v270
      %v276 = vadd.f32 %v253, %v270
      %v277 = vadd.f32 %v254, %v270
      %v278 = vadd.f32 %v255, %v270
      %v279 = vadd.f32 %v256, %v270
      %v280 = vadd.f32 %v257, %v270
      %v281 = vadd.f32 %v258, %v270
      %v282 = vadd.f32 %v259, %v270
      %v283 = vadd.f32 %v260, %v270
      %v284 = vadd.f32 %v261, %v270
      %v285 = vadd.f32 %v262, %v270
      %v286 = vadd.f32 %v263, %v270
      %v287 = vadd.f32 %v264, %v270
      %v288 = vmax.f32 %v272, 0.0
      %v289 = vmax.f32 %v273, 0.0
      %v290 = vmax.f32 %v274, 0.0
      %v291 = vmax.f32 %v275, 0.0
      %v292 = vmax.f32 %v276, 0.0
      %v293 = vmax.f32 %v277, 0.0
      %v294 = vmax.f32 %v278, 0.0
      %v295 = vmax.f32 %v279, 0.0
      %v296 = vmax.f32 %v280, 0.0
      %v297 = vmax.f32 %v281, 0.0
      %v298 = vmax.f32 %v282, 0.0
      %v299 = vmax.f32 %v283, 0.0
      %v300 = vmax.f32 %v284, 0.0
      %v301 = vmax.f32 %v285, 0.0
      %v302 = vmax.f32 %v286, 0.0
      %v303 = vmax.f32 %v287, 0.0
      %304 = vxpose.xlu0.b32.start [1/16] %v288, 128
      %305 = vxpose.xlu0.b32.cont [2/16] %v289, 128
      %306 = vxpose.xlu0.b32.cont [3/16] %v290, 128
      %307 = vxpose.xlu0.b32.cont [4/16] %v291, 128
      %308 = vxpose.xlu0.b32.cont [5/16] %v292, 128
      %309 = vxpose.xlu0.b32.cont [6/16] %v293, 128
      %310 = vxpose.xlu0.b32.cont [7/16] %v294, 128
      %311 = vxpose.xlu0.b32.cont [8/16] %v295, 128
      %312 = vxpose.xlu0.b32.cont [9/16] %v296, 128
      %313 = vxpose.xlu0.b32.cont [10/16] %v297, 128
      %314 = vxpose.xlu0.b32.cont [11/16] %v298, 128
      %315 = vxpose.xlu0.b32.cont [12/16] %v299, 128
      %316 = vxpose.xlu0.b32.cont [13/16] %v300, 128
      %317 = vxpose.xlu0.b32.cont [14/16] %v301, 128
      %318 = vxpose.xlu0.b32.cont [15/16] %v302, 128
      %319 = vxpose.xlu0.b32.end [16/16] %v303, 128
      %v320 = vpop.trf.xlu0
      %v321 = vpop.trf.xlu0
      %v322 = vpop.trf.xlu0
      %v323 = vpop.trf.xlu0
      %v324 = vpop.trf.xlu0
      %v325 = vpop.trf.xlu0
      %v326 = vpop.trf.xlu0
      %v327 = vpop.trf.xlu0
      %v328 = vpop.trf.xlu0
      %v329 = vpop.trf.xlu0
      %v330 = vpop.trf.xlu0
      %v331 = vpop.trf.xlu0
      %v332 = vpop.trf.xlu0
      %v333 = vpop.trf.xlu0
      %v334 = vpop.trf.xlu0
      %v335 = vpop.trf.xlu0
      %336 = vst [vmem:[%s209] sm:$0xff] %v320
      %p337 = scmp.lt.s32.totalorder %s18, 1
      %s338 = scalar_select %p337, %s18, 1
      %p339 = scmp.lt.s32.totalorder %s19, 1
      %s340 = scalar_select %p339, %s19, 1
      %s341 = smul.addr %s338, 2
      %s342 = sadd.s32 %s340, %s341
      %s343 = smul.addr %s342, 8
      %s344 = scalar_lea.vmem %s3, %s343
      // Predicated region
      $region33: #{double_conv.7} parent=31 // pred_check
        %p345 = pneg %p116
      $region34: #{double_conv.7} parent=31 // pred_check_branch
        %347 = sbr.rel (%p345) target = $region36
      $region35: #{double_conv.7} parent=31 // pred_region
        _
      $region36: #{double_conv.7} parent=31 // pred_fallthru
        _
    $region32: #{double_conv.7} parent=5 // pred_fallthru
      _
    %p348 = scmp.le.s32.totalorder 2, %s9
    // Predicated region
    $region37: #{double_conv.7} parent=5 // pred_check
      %p349 = pneg %p348
    $region38: #{double_conv.7} parent=5 // pred_check_branch
      %351 = sbr.rel (%p349) target = $region40
    $region39: #{double_conv.7} parent=5 // pred_region
      %s352 = ssub.s32 %s9, 2
      // Predicated region
      $region41: #{double_conv.7} parent=39 // pred_check
        %p353 = pneg %p122
      $region42: #{double_conv.7} parent=39 // pred_check_branch
        %355 = sbr.rel (%p353) target = $region44
      $region43: #{double_conv.7} parent=39 // pred_region
        %p356 = scmp.lt.s32.totalorder %s20, 1
        %s357 = scalar_select %p356, %s20, 1
        %p358 = scmp.lt.s32.totalorder %s21, 1
        %s359 = scalar_select %p358, %s21, 1
        %s360 = smul.addr %s357, 2
        %s361 = sadd.s32 %s359, %s360
        %s362 = smul.addr %s361, 8
        %s363 = scalar_lea.vmem %s3, %s362
      $region44: #{double_conv.7} parent=39 // pred_fallthru
        _
    $region40: #{double_conv.7} parent=5 // pred_fallthru
      _
  $region6: #{double_conv.7} parent=0 // loop_footer
    %s13 = sadd.s32 1, %s9
  $region7: #{double_conv.7} parent=0 // loop_footer_branch
    %8 = sbr.rel target = $region3
  $region8: #{double_conv.7} parent=0 // loop_exit
    _

// kernel: double_conv.5
$region0: #{double_conv.5}
  #allocation0 [shape = 'u32[]', space=smem, size = 0x4, offset = 0x4, fixed_abs, tag = 'smem constant byte address 0x4 - core index']
  #allocation1 [shape = 'u32[144,128]{1,0:T(1,128)}', space=vmem, size = 0x12000, scoped, tag = 'internal scratch']
  %s0 = inlined_call_operand.vmem [shape: bf16[2,16,16,128], index: 0, kind: input, shape index: {}]
  %s1 = inlined_call_operand.vmem [shape: f32[1,128], index: 1, kind: input, shape index: {}]
  %s2 = inlined_call_operand.vmem [shape: f32[1,128], index: 2, kind: input, shape index: {}]
  %s3 = inlined_call_operand.vmem [shape: bf16[2,16,18,128], index: 3, kind: output, shape index: {}]
  %s4 = sld [smem:[#allocation0]]
  $region45: #{double_conv.5} parent=0
    _
  %s6 = ssub.s32 1, %s4
  %s7 = scalar_select 0, %s6, %s4
  loop: start=0, step=1, limit=6
  $region2: #{double_conv.5} parent=0 // loop_pre_header
    _
  $region3: #{double_conv.5} parent=0 // loop_header
    %s9 = sphi 0, %s13
    %p10 = scmp.ge.s32.totalorder %s9, 6
    %s16 = sphi 0, %s28
    %s17 = sphi 0, %s24
    %s18 = sphi 0, %s16
    %s19 = sphi 0, %s17
    %s20 = sphi 0, %s18
    %s21 = sphi 0, %s19
    %s33 = sphi 0, %s35
    %s36 = sphi 0, %s33
    %s37 = sphi 0, %s36
    %s53 = sphi 0, %s37
    %s57 = sphi 0, %s57
    %s59 = sphi 0, %s57
    %s60 = sphi 0, %s59
    %s74 = sphi 0, %s60
    %s78 = sphi 0, %s78
    %s80 = sphi 0, %s78
    %s81 = sphi 0, %s80
    %s95 = sphi 0, %s81
    %s103 = sphi 0, %s105
    %s106 = sphi 0, %s103
    %s107 = sphi 0, %s106
    %s123 = sphi 0, %s107
  $region4: #{double_conv.5} parent=0 // loop_header_branch
    %12 = sbr.rel (%p10) target = $region8
  $region5: #{double_conv.5} parent=0 // loop_body
    %s14 = ssub.s32 %s9, 1
    %s15 = ssub.s32 %s9, 2
    %s22 = sadd.s32 1, %s17
    %p23 = scmp.ge.s32.totalorder %s22, 2
    %s24 = scalar_select %p23, 0, %s22
    %s25 = sadd.s32 1, %s16
    %s26 = scalar_select %p23, %s25, %s16
    %p27 = scmp.ge.s32.totalorder %s26, 2
    %s28 = scalar_select %p27, 0, %s26
    %s29 = ssub.s32 %s16, %s28
    %s30 = ssub.s32 %s17, %s24
    %s31 = sor.u32 %s29, %s30
    %p32 = scmp.eq.s32.totalorder %s31, 0
    %s34 = sadd.s32 %s33, 1
    %s35 = scalar_select %p32, %s33, %s34
    %p38 = pneg %p32
    %p39 = scmp.eq.s32.totalorder %s9, 3
    %p40 = por %p38, %p39
    %p41 = scmp.ne.s32.totalorder %s33, %s36
    %p42 = scmp.eq.s32.totalorder %s9, 0
    %p43 = por %p41, %p42
    %p44 = scmp.ne.s32.totalorder %s33, %s36
    %p45 = scmp.eq.s32.totalorder %s14, 3
    %p46 = por %p44, %p45
    %p47 = scmp.ne.s32.totalorder %s36, %s37
    %p48 = scmp.eq.s32.totalorder %s14, 0
    %p49 = por %p47, %p48
    %p50 = scmp.ne.s32.totalorder %s36, %s37
    %p51 = scmp.eq.s32.totalorder %s15, 3
    %p52 = por %p50, %p51
    %p54 = scmp.ne.s32.totalorder %s37, %s53
    %p55 = scmp.eq.s32.totalorder %s15, 0
    %p56 = por %p54, %p55
    %s58 = sadd.s32 %s57, 1
    %p61 = scmp.eq.s32.totalorder %s9, 3
    %p62 = scmp.ne.s32.totalorder %s57, %s59
    %p63 = scmp.eq.s32.totalorder %s9, 0
    %p64 = por %p62, %p63
    %p65 = scmp.ne.s32.totalorder %s57, %s59
    %p66 = scmp.eq.s32.totalorder %s14, 3
    %p67 = por %p65, %p66
    %p68 = scmp.ne.s32.totalorder %s59, %s60
    %p69 = scmp.eq.s32.totalorder %s14, 0
    %p70 = por %p68, %p69
    %p71 = scmp.ne.s32.totalorder %s59, %s60
    %p72 = scmp.eq.s32.totalorder %s15, 3
    %p73 = por %p71, %p72
    %p75 = scmp.ne.s32.totalorder %s60, %s74
    %p76 = scmp.eq.s32.totalorder %s15, 0
    %p77 = por %p75, %p76
    %s79 = sadd.s32 %s78, 1
    %p82 = scmp.eq.s32.totalorder %s9, 3
    %p83 = scmp.ne.s32.totalorder %s78, %s80
    %p84 = scmp.eq.s32.totalorder %s9, 0
    %p85 = por %p83, %p84
    %p86 = scmp.ne.s32.totalorder %s78, %s80
    %p87 = scmp.eq.s32.totalorder %s14, 3
    %p88 = por %p86, %p87
    %p89 = scmp.ne.s32.totalorder %s80, %s81
    %p90 = scmp.eq.s32.totalorder %s14, 0
    %p91 = por %p89, %p90
    %p92 = scmp.ne.s32.totalorder %s80, %s81
    %p93 = scmp.eq.s32.totalorder %s15, 3
    %p94 = por %p92, %p93
    %p96 = scmp.ne.s32.totalorder %s81, %s95
    %p97 = scmp.eq.s32.totalorder %s15, 0
    %p98 = por %p96, %p97
    %s99 = ssub.s32 %s16, %s28
    %s100 = ssub.s32 %s17, %s24
    %s101 = sor.u32 %s99, %s100
    %p102 = scmp.eq.s32.totalorder %s101, 0
    %s104 = sadd.s32 %s103, 1
    %s105 = scalar_select %p102, %s103, %s104
    %p108 = pneg %p102
    %p109 = scmp.eq.s32.totalorder %s9, 3
    %p110 = por %p108, %p109
    %p111 = scmp.ne.s32.totalorder %s103, %s106
    %p112 = scmp.eq.s32.totalorder %s9, 0
    %p113 = por %p111, %p112
    %p114 = scmp.ne.s32.totalorder %s103, %s106
    %p115 = scmp.eq.s32.totalorder %s14, 3
    %p116 = por %p114, %p115
    %p117 = scmp.ne.s32.totalorder %s106, %s107
    %p118 = scmp.eq.s32.totalorder %s14, 0
    %p119 = por %p117, %p118
    %p120 = scmp.ne.s32.totalorder %s106, %s107
    %p121 = scmp.eq.s32.totalorder %s15, 3
    %p122 = por %p120, %p121
    %p124 = scmp.ne.s32.totalorder %s107, %s123
    %p125 = scmp.eq.s32.totalorder %s15, 0
    %p126 = por %p124, %p125
    %p127 = scmp.le.s32.totalorder 1, %s9
    %p128 = scmp.lt.s32.totalorder %s9, 5
    %p129 = pnand %p127, %p128
    %p130 = pneg %p129
    // Predicated region
    $region9: #{double_conv.5} parent=5 // pred_check
      _
    $region10: #{double_conv.5} parent=5 // pred_check_branch
      %132 = sbr.rel (%p129) target = $region12
    $region11: #{double_conv.5} parent=5 // pred_region
      %s133 = ssub.s32 %s9, 1
      // Predicated region
      $region13: #{double_conv.5} parent=11 // pred_check
        %p134 = pneg %p70
      $region14: #{double_conv.5} parent=11 // pred_check_branch
        %136 = sbr.rel (%p134) target = $region16
      $region15: #{double_conv.5} parent=11 // pred_region
        _
      $region16: #{double_conv.5} parent=11 // pred_fallthru
        _
      // Predicated region
      $region17: #{double_conv.5} parent=11 // pred_check
        %p137 = pneg %p91
      $region18: #{double_conv.5} parent=11 // pred_check_branch
        %139 = sbr.rel (%p137) target = $region20
      $region19: #{double_conv.5} parent=11 // pred_region
        _
      $region20: #{double_conv.5} parent=11 // pred_fallthru
        _
    $region12: #{double_conv.5} parent=5 // pred_fallthru
      _
    %p140 = scmp.lt.s32.totalorder %s9, 4
    // Predicated region
    $region21: #{double_conv.5} parent=5 // pred_check
      %p141 = pneg %p140
    $region22: #{double_conv.5} parent=5 // pred_check_branch
      %143 = sbr.rel (%p141) target = $region24
    $region23: #{double_conv.5} parent=5 // pred_region
      // Predicated region
      $region25: #{double_conv.5} parent=23 // pred_check
        %p144 = pneg %p43
      $region26: #{double_conv.5} parent=23 // pred_check_branch
        %146 = sbr.rel (%p144) target = $region28
      $region27: #{double_conv.5} parent=23 // pred_region
        %s147 = smul.u32 8, %s17
        %p148 = scmp.lt.s32.totalorder %s16, 1
        %s149 = scalar_select %p148, %s16, 1
        %p150 = scmp.lt.s32.totalorder %s147, 15
        %s151 = scalar_select %p150, %s147, 15
        %s152 = smul.addr %s151, 2
        %s153 = smul.addr %s149, 32
        %s154 = sadd.s32 %s152, %s153
        %s155 = smul.addr %s154, 4
        %s156 = scalar_lea.vmem %s0, %s155
        %s157 = smul.u32 8, %s17
      $region28: #{double_conv.5} parent=23 // pred_fallthru
        _
    $region24: #{double_conv.5} parent=5 // pred_fallthru
      _
    %p158 = scmp.le.s32.totalorder 1, %s9
    %p159 = scmp.lt.s32.totalorder %s9, 5
    %p160 = pnand %p158, %p159
    %p161 = pneg %p160
    // Predicated region
    $region29: #{double_conv.5} parent=5 // pred_check
      _
    $region30: #{double_conv.5} parent=5 // pred_check_branch
      %163 = sbr.rel (%p160) target = $region32
    $region31: #{double_conv.5} parent=5 // pred_region
      %s164 = ssub.s32 %s9, 1
      %s165 = smul.u32 8, %s19
      %p166 = scmp.lt.s32.totalorder %s18, 1
      %s167 = scalar_select %p166, %s18, 1
      %p168 = scmp.lt.s32.totalorder %s165, 15
      %s169 = scalar_select %p168, %s165, 15
      %s170 = smul.addr %s169, 2
      %s171 = smul.addr %s167, 32
      %s172 = sadd.s32 %s170, %s171
      %s173 = smul.addr %s172, 4
      %s174 = scalar_lea.vmem %s0, %s173
      %p175 = pneg %p49
      %p176 = pneg %p46
      %p177 = pneg %p70
      %p178 = pneg %p67
      %p179 = pneg %p91
      %p180 = pneg %p88
      %p181 = pneg %p119
      %p182 = pneg %p116
      %s183 = smul.u32 8, %s19
      %p184 = scmp.lt.s32.totalorder %s18, 1
      %s185 = scalar_select %p184, %s18, 1
      %p186 = scmp.lt.s32.totalorder %s183, 15
      %s187 = scalar_select %p186, %s183, 15
      %s188 = smul.addr %s187, 3
      %s189 = smul.addr %s185, 48
      %s190 = sadd.s32 %s188, %s189
      %s191 = smul.addr %s190, 4
      %s192 = scalar_lea.vmem %s3, %s191
      %s193 = smul.u32 8, %s19
      %p194 = scmp.lt.s32.totalorder %s18, 1
      %s195 = scalar_select %p194, %s18, 1
      %p196 = scmp.lt.s32.totalorder %s193, 15
      %s197 = scalar_select %p196, %s193, 15
      %s198 = smul.addr %s197, 2
      %s199 = smul.addr %s195, 32
      %s200 = sadd.s32 %s198, %s199
      %s201 = smul.addr %s200, 4
      %s202 = scalar_lea.vmem %s0, %s201
      %s203 = smul.u32 8, %s19
      %s204 = smul.u32 8, %s19
      %p205 = scmp.lt.s32.totalorder %s18, 1
      %s206 = scalar_select %p205, %s18, 1
      %p207 = scmp.lt.s32.totalorder %s204, 15
      %s208 = scalar_select %p207, %s204, 15
      %s209 = smul.addr %s208, 3
      %s210 = smul.addr %s206, 48
      %s211 = sadd.s32 %s209, %s210
      %s212 = smul.addr %s211, 4
      %s213 = scalar_lea.vmem %s3, %s212
      %s214 = smul.u32 8, %s19
      %v216 = vld [vmem:[%s1] sm:$0x1]
      %v217 = vld [vmem:[%s2] sm:$0x1]
      %v218 = vld [vmem:[%s202] sm:$0xf]
      %v219 = vld [vmem:[%s202 + $0x4] sm:$0xf]
      %v220 = vld [vmem:[%s202 + $0x8] sm:$0xf]
      %v221 = vld [vmem:[%s202 + $0xc] sm:$0xf]
      %v222 = vld [vmem:[%s202 + $0x10] sm:$0xf]
      %v223 = vld [vmem:[%s202 + $0x14] sm:$0xf]
      %v224 = vld [vmem:[%s202 + $0x18] sm:$0xf]
      %v225 = vld [vmem:[%s202 + $0x1c] sm:$0xf]
      %v226 = vld [vmem:[%s202 + $0x20] sm:$0xf]
      %v227 = vld [vmem:[%s202 + $0x24] sm:$0xf]
      %v228 = vld [vmem:[%s202 + $0x28] sm:$0xf]
      %v229 = vld [vmem:[%s202 + $0x2c] sm:$0xf]
      %v230 = vld [vmem:[%s202 + $0x30] sm:$0xf]
      %v231 = vld [vmem:[%s202 + $0x34] sm:$0xf]
      %v232 = vld [vmem:[%s202 + $0x38] sm:$0xf]
      %v233 = vld [vmem:[%s202 + $0x3c] sm:$0xf]
      %v234 = vunpack.c.l.bf16 %v218
      %v235 = vunpack.c.l.bf16 %v219
      %v236 = vunpack.c.l.bf16 %v220
      %v237 = vunpack.c.l.bf16 %v221
      %v238 = vunpack.c.l.bf16 %v222
      %v239 = vunpack.c.l.bf16 %v223
      %v240 = vunpack.c.l.bf16 %v224
      %v241 = vunpack.c.l.bf16 %v225
      %v242 = vunpack.c.l.bf16 %v226
      %v243 = vunpack.c.l.bf16 %v227
      %v244 = vunpack.c.l.bf16 %v228
      %v245 = vunpack.c.l.bf16 %v229
      %v246 = vunpack.c.l.bf16 %v230
      %v247 = vunpack.c.l.bf16 %v231
      %v248 = vunpack.c.l.bf16 %v232
      %v249 = vunpack.c.l.bf16 %v233
      %v251 = vlaneseq
      %v252 = vshrl.u32 %v251, 7
      %v253 = vsub.s32 0, %v252
      %v254 = vrot.slane %v216, %v253
      %v256 = vmul.f32 %v234, %v254
      %v257 = vmul.f32 %v235, %v254
      %v258 = vmul.f32 %v236, %v254
      %v259 = vmul.f32 %v237, %v254
      %v260 = vmul.f32 %v238, %v254
      %v261 = vmul.f32 %v239, %v254
      %v262 = vmul.f32 %v240, %v254
      %v263 = vmul.f32 %v241, %v254
      %v264 = vmul.f32 %v242, %v254
      %v265 = vmul.f32 %v243, %v254
      %v266 = vmul.f32 %v244, %v254
      %v267 = vmul.f32 %v245, %v254
      %v268 = vmul.f32 %v246, %v254
      %v269 = vmul.f32 %v247, %v254
      %v270 = vmul.f32 %v248, %v254
      %v271 = vmul.f32 %v249, %v254
      %v273 = vlaneseq
      %v274 = vshrl.u32 %v273, 7
      %v275 = vsub.s32 0, %v274
      %v276 = vrot.slane %v217, %v275
      %v278 = vadd.f32 %v256, %v276
      %v279 = vadd.f32 %v257, %v276
      %v280 = vadd.f32 %v258, %v276
      %v281 = vadd.f32 %v259, %v276
      %v282 = vadd.f32 %v260, %v276
      %v283 = vadd.f32 %v261, %v276
      %v284 = vadd.f32 %v262, %v276
      %v285 = vadd.f32 %v263, %v276
      %v286 = vadd.f32 %v264, %v276
      %v287 = vadd.f32 %v265, %v276
      %v288 = vadd.f32 %v266, %v276
      %v289 = vadd.f32 %v267, %v276
      %v290 = vadd.f32 %v268, %v276
      %v291 = vadd.f32 %v269, %v276
      %v292 = vadd.f32 %v270, %v276
      %v293 = vadd.f32 %v271, %v276
      %v294 = vmax.f32 %v278, 0.0
      %v295 = vmax.f32 %v279, 0.0
      %v296 = vmax.f32 %v280, 0.0
      %v297 = vmax.f32 %v281, 0.0
      %v298 = vmax.f32 %v282, 0.0
      %v299 = vmax.f32 %v283, 0.0
      %v300 = vmax.f32 %v284, 0.0
      %v301 = vmax.f32 %v285, 0.0
      %v302 = vmax.f32 %v286, 0.0
      %v303 = vmax.f32 %v287, 0.0
      %v304 = vmax.f32 %v288, 0.0
      %v305 = vmax.f32 %v289, 0.0
      %v306 = vmax.f32 %v290, 0.0
      %v307 = vmax.f32 %v291, 0.0
      %v308 = vmax.f32 %v292, 0.0
      %v309 = vmax.f32 %v293, 0.0
      %v310 = vpack.c.bf16 %v295, %v294
      %v311 = vpack.c.bf16 %v297, %v296
      %v312 = vpack.c.bf16 %v299, %v298
      %v313 = vpack.c.bf16 %v301, %v300
      %v314 = vpack.c.bf16 %v303, %v302
      %v315 = vpack.c.bf16 %v305, %v304
      %v316 = vpack.c.bf16 %v307, %v306
      %v317 = vpack.c.bf16 %v309, %v308
      %vm318 = vcmask 1040384
      %vm319 = vsmask.f32 256
      %vm320 = vmand %vm318, %vm319
      %v321 = vld [vmem:[%s213] sm:$0x1]
      %v322 = vsel %vm320, 0, %v321
      %323 = vst [vmem:[%s213] sm:$0x1] %v322
      %v324 = vld [vmem:[%s213 + $0xc] sm:$0x1]
      %v325 = vsel %vm320, 0, %v324
      %326 = vst [vmem:[%s213 + $0xc] sm:$0x1] %v325
      %v327 = vld [vmem:[%s213 + $0x18] sm:$0x1]
      %v328 = vsel %vm320, 0, %v327
      %329 = vst [vmem:[%s213 + $0x18] sm:$0x1] %v328
      %v330 = vld [vmem:[%s213 + $0x24] sm:$0x1]
      %v331 = vsel %vm320, 0, %v330
      %332 = vst [vmem:[%s213 + $0x24] sm:$0x1] %v331
      %v333 = vld [vmem:[%s213 + $0x30] sm:$0x1]
      %v334 = vsel %vm320, 0, %v333
      %335 = vst [vmem:[%s213 + $0x30] sm:$0x1] %v334
      %v336 = vld [vmem:[%s213 + $0x3c] sm:$0x1]
      %v337 = vsel %vm320, 0, %v336
      %338 = vst [vmem:[%s213 + $0x3c] sm:$0x1] %v337
      %v339 = vld [vmem:[%s213 + $0x48] sm:$0x1]
      %v340 = vsel %vm320, 0, %v339
      %341 = vst [vmem:[%s213 + $0x48] sm:$0x1] %v340
      %v342 = vld [vmem:[%s213 + $0x54] sm:$0x1]
      %v343 = vsel %vm320, 0, %v342
      %344 = vst [vmem:[%s213 + $0x54] sm:$0x1] %v343
      %vm345 = vsmask.f32 7938
      %vm346 = vmand %vm318, %vm345
      %v347 = vld [vmem:[%s213 + $0x8] sm:$0x1]
      %v348 = vsel %vm346, 0, %v347
      %349 = vst [vmem:[%s213 + $0x8] sm:$0x1] %v348
      %v350 = vld [vmem:[%s213 + $0x14] sm:$0x1]
      %v351 = vsel %vm346, 0, %v350
      %352 = vst [vmem:[%s213 + $0x14] sm:$0x1] %v351
      %v353 = vld [vmem:[%s213 + $0x20] sm:$0x1]
      %v354 = vsel %vm346, 0, %v353
      %355 = vst [vmem:[%s213 + $0x20] sm:$0x1] %v354
      %v356 = vld [vmem:[%s213 + $0x2c] sm:$0x1]
      %v357 = vsel %vm346, 0, %v356
      %358 = vst [vmem:[%s213 + $0x2c] sm:$0x1] %v357
      %v359 = vld [vmem:[%s213 + $0x38] sm:$0x1]
      %v360 = vsel %vm346, 0, %v359
      %361 = vst [vmem:[%s213 + $0x38] sm:$0x1] %v360
      %v362 = vld [vmem:[%s213 + $0x44] sm:$0x1]
      %v363 = vsel %vm346, 0, %v362
      %364 = vst [vmem:[%s213 + $0x44] sm:$0x1] %v363
      %v365 = vld [vmem:[%s213 + $0x50] sm:$0x1]
      %v366 = vsel %vm346, 0, %v365
      %367 = vst [vmem:[%s213 + $0x50] sm:$0x1] %v366
      %v368 = vld [vmem:[%s213 + $0x5c] sm:$0x1]
      %v369 = vsel %vm346, 0, %v368
      %370 = vst [vmem:[%s213 + $0x5c] sm:$0x1] %v369
      %v379 = vunpack.c.l.b16 %v310
      %v380 = vunpack.c.h.b16 %v310
      %v381 = vunpack.c.l.b16 %v311
      %v382 = vunpack.c.h.b16 %v311
      %v383 = vunpack.c.l.b16 %v312
      %v384 = vunpack.c.h.b16 %v312
      %v385 = vunpack.c.l.b16 %v313
      %v386 = vunpack.c.h.b16 %v313
      %v387 = vunpack.c.l.b16 %v314
      %v388 = vunpack.c.h.b16 %v314
      %v389 = vunpack.c.l.b16 %v315
      %v390 = vunpack.c.h.b16 %v315
      %v391 = vunpack.c.l.b16 %v316
      %v392 = vunpack.c.h.b16 %v316
      %v393 = vunpack.c.l.b16 %v317
      %v394 = vunpack.c.h.b16 %v317
      %v395 = vpack.c.b16 %v379, %v379
      %v396 = vpack.c.b16 %v380, %v380
      %v397 = vpack.c.b16 %v381, %v381
      %v398 = vpack.c.b16 %v382, %v382
      %v399 = vpack.c.b16 %v383, %v383
      %v400 = vpack.c.b16 %v384, %v384
      %v401 = vpack.c.b16 %v385, %v385
      %v402 = vpack.c.b16 %v386, %v386
      %v403 = vpack.c.b16 %v387, %v387
      %v404 = vpack.c.b16 %v388, %v388
      %v405 = vpack.c.b16 %v389, %v389
      %v406 = vpack.c.b16 %v390, %v390
      %v407 = vpack.c.b16 %v391, %v391
      %v408 = vpack.c.b16 %v392, %v392
      %v409 = vpack.c.b16 %v393, %v393
      %v410 = vpack.c.b16 %v394, %v394
      %vm411 = vsmask.f32 4368
      %vm412 = vmor %vm319, %vm411
      %v414 = vshrl.u32 %v395, 16
      %v416 = vrot.slane %v414, 7
      %v417 = vshll.u32 %v395, 16
      %v419 = vor.u32 %v416, %v417
      %v420 = vrot.slane %v416, 4
      %v422 = vshrl.u32 %v396, 16
      %v424 = vrot.slane %v422, 7
      %v425 = vshll.u32 %v396, 16
      %v427 = vor.u32 %v424, %v425
      %v428 = vsel %vm412, %v420, %v427
      %v429 = vrot.slane %v424, 4
      %v431 = vshrl.u32 %v397, 16
      %v433 = vrot.slane %v431, 7
      %v434 = vshll.u32 %v397, 16
      %v436 = vor.u32 %v433, %v434
      %v437 = vrot.slane %v433, 4
      %v439 = vshrl.u32 %v398, 16
      %v441 = vrot.slane %v439, 7
      %v442 = vshll.u32 %v398, 16
      %v444 = vor.u32 %v441, %v442
      %v445 = vsel %vm412, %v437, %v444
      %v446 = vrot.slane %v441, 4
      %v448 = vshrl.u32 %v399, 16
      %v450 = vrot.slane %v448, 7
      %v451 = vshll.u32 %v399, 16
      %v453 = vor.u32 %v450, %v451
      %v454 = vrot.slane %v450, 4
      %v456 = vshrl.u32 %v400, 16
      %v458 = vrot.slane %v456, 7
      %v459 = vshll.u32 %v400, 16
      %v461 = vor.u32 %v458, %v459
      %v462 = vsel %vm412, %v454, %v461
      %v463 = vrot.slane %v458, 4
      %v465 = vshrl.u32 %v401, 16
      %v467 = vrot.slane %v465, 7
      %v468 = vshll.u32 %v401, 16
      %v470 = vor.u32 %v467, %v468
      %v471 = vrot.slane %v467, 4
      %v473 = vshrl.u32 %v402, 16
      %v475 = vrot.slane %v473, 7
      %v476 = vshll.u32 %v402, 16
      %v478 = vor.u32 %v475, %v476
      %v479 = vsel %vm412, %v471, %v478
      %v480 = vrot.slane %v475, 4
      %v482 = vshrl.u32 %v403, 16
      %v484 = vrot.slane %v482, 7
      %v485 = vshll.u32 %v403, 16
      %v487 = vor.u32 %v484, %v485
      %v488 = vrot.slane %v484, 4
      %v490 = vshrl.u32 %v404, 16
      %v492 = vrot.slane %v490, 7
      %v493 = vshll.u32 %v404, 16
      %v495 = vor.u32 %v492, %v493
      %v496 = vsel %vm412, %v488, %v495
      %v497 = vrot.slane %v492, 4
      %v499 = vshrl.u32 %v405, 16
      %v501 = vrot.slane %v499, 7
      %v502 = vshll.u32 %v405, 16
      %v504 = vor.u32 %v501, %v502
      %v505 = vrot.slane %v501, 4
      %v507 = vshrl.u32 %v406, 16
      %v509 = vrot.slane %v507, 7
      %v510 = vshll.u32 %v406, 16
      %v512 = vor.u32 %v509, %v510
      %v513 = vsel %vm412, %v505, %v512
      %v514 = vrot.slane %v509, 4
      %v516 = vshrl.u32 %v407, 16
      %v518 = vrot.slane %v516, 7
      %v519 = vshll.u32 %v407, 16
      %v521 = vor.u32 %v518, %v519
      %v522 = vrot.slane %v518, 4
      %v524 = vshrl.u32 %v408, 16
      %v526 = vrot.slane %v524, 7
      %v527 = vshll.u32 %v408, 16
      %v529 = vor.u32 %v526, %v527
      %v530 = vsel %vm412, %v522, %v529
      %v531 = vrot.slane %v526, 4
      %v533 = vshrl.u32 %v409, 16
      %v535 = vrot.slane %v533, 7
      %v536 = vshll.u32 %v409, 16
      %v538 = vor.u32 %v535, %v536
      %v539 = vrot.slane %v535, 4
      %v541 = vshrl.u32 %v410, 16
      %v543 = vrot.slane %v541, 7
      %v544 = vshll.u32 %v410, 16
      %v546 = vor.u32 %v543, %v544
      %v547 = vsel %vm412, %v539, %v546
      %v548 = vrot.slane %v543, 4
      %vm573 = vcmask 1043456
      %vm574 = vmand %vm573, %vm345
      %v575 = vld [vmem:[%s213] sm:$0xf]
      %v576 = vsel %vm574, %v419, %v575
      %577 = vst [vmem:[%s213] sm:$0xf] %v576
      %578 = vst [vmem:[%s213 + $0x4] sm:$0xf] %v428
      %v579 = vld [vmem:[%s213 + $0x8] sm:$0x1]
      %v580 = vsel %vm320, %v429, %v579
      %581 = vst [vmem:[%s213 + $0x8] sm:$0x1] %v580
      %v582 = vld [vmem:[%s213 + $0xc] sm:$0xf]
      %v583 = vsel %vm574, %v436, %v582
      %584 = vst [vmem:[%s213 + $0xc] sm:$0xf] %v583
      %585 = vst [vmem:[%s213 + $0x10] sm:$0xf] %v445
      %v586 = vld [vmem:[%s213 + $0x14] sm:$0x1]
      %v587 = vsel %vm320, %v446, %v586
      %588 = vst [vmem:[%s213 + $0x14] sm:$0x1] %v587
      %v589 = vld [vmem:[%s213 + $0x18] sm:$0xf]
      %v590 = vsel %vm574, %v453, %v589
      %591 = vst [vmem:[%s213 + $0x18] sm:$0xf] %v590
      %592 = vst [vmem:[%s213 + $0x1c] sm:$0xf] %v462
      %v593 = vld [vmem:[%s213 + $0x20] sm:$0x1]
      %v594 = vsel %vm320, %v463, %v593
      %595 = vst [vmem:[%s213 + $0x20] sm:$0x1] %v594
      %v596 = vld [vmem:[%s213 + $0x24] sm:$0xf]
      %v597 = vsel %vm574, %v470, %v596
      %598 = vst [vmem:[%s213 + $0x24] sm:$0xf] %v597
      %599 = vst [vmem:[%s213 + $0x28] sm:$0xf] %v479
      %v600 = vld [vmem:[%s213 + $0x2c] sm:$0x1]
      %v601 = vsel %vm320, %v480, %v600
      %602 = vst [vmem:[%s213 + $0x2c] sm:$0x1] %v601
      %v603 = vld [vmem:[%s213 + $0x30] sm:$0xf]
      %v604 = vsel %vm574, %v487, %v603
      %605 = vst [vmem:[%s213 + $0x30] sm:$0xf] %v604
      %606 = vst [vmem:[%s213 + $0x34] sm:$0xf] %v496
      %v607 = vld [vmem:[%s213 + $0x38] sm:$0x1]
      %v608 = vsel %vm320, %v497, %v607
      %609 = vst [vmem:[%s213 + $0x38] sm:$0x1] %v608
      %v610 = vld [vmem:[%s213 + $0x3c] sm:$0xf]
      %v611 = vsel %vm574, %v504, %v610
      %612 = vst [vmem:[%s213 + $0x3c] sm:$0xf] %v611
      %613 = vst [vmem:[%s213 + $0x40] sm:$0xf] %v513
      %v614 = vld [vmem:[%s213 + $0x44] sm:$0x1]
      %v615 = vsel %vm320, %v514, %v614
      %616 = vst [vmem:[%s213 + $0x44] sm:$0x1] %v615
      %v617 = vld [vmem:[%s213 + $0x48] sm:$0xf]
      %v618 = vsel %vm574, %v521, %v617
      %619 = vst [vmem:[%s213 + $0x48] sm:$0xf] %v618
      %620 = vst [vmem:[%s213 + $0x4c] sm:$0xf] %v530
      %v621 = vld [vmem:[%s213 + $0x50] sm:$0x1]
      %v622 = vsel %vm320, %v531, %v621
      %623 = vst [vmem:[%s213 + $0x50] sm:$0x1] %v622
      %v624 = vld [vmem:[%s213 + $0x54] sm:$0xf]
      %v625 = vsel %vm574, %v538, %v624
      %626 = vst [vmem:[%s213 + $0x54] sm:$0xf] %v625
      %627 = vst [vmem:[%s213 + $0x58] sm:$0xf] %v547
      %v628 = vld [vmem:[%s213 + $0x5c] sm:$0x1]
      %v629 = vsel %vm320, %v548, %v628
      %630 = vst [vmem:[%s213 + $0x5c] sm:$0x1] %v629
      %s631 = smul.u32 8, %s19
      %p632 = scmp.lt.s32.totalorder %s18, 1
      %s633 = scalar_select %p632, %s18, 1
      %p634 = scmp.lt.s32.totalorder %s631, 15
      %s635 = scalar_select %p634, %s631, 15
      %s636 = smul.addr %s635, 3
      %s637 = smul.addr %s633, 48
      %s638 = sadd.s32 %s636, %s637
      %s639 = smul.addr %s638, 4
      %s640 = scalar_lea.vmem %s3, %s639
      // Predicated region
      $region33: #{double_conv.5} parent=31 // pred_check
        %p641 = pneg %p116
      $region34: #{double_conv.5} parent=31 // pred_check_branch
        %643 = sbr.rel (%p641) target = $region36
      $region35: #{double_conv.5} parent=31 // pred_region
        %s644 = smul.u32 8, %s19
      $region36: #{double_conv.5} parent=31 // pred_fallthru
        _
    $region32: #{double_conv.5} parent=5 // pred_fallthru
      _
    %p645 = scmp.le.s32.totalorder 2, %s9
    // Predicated region
    $region37: #{double_conv.5} parent=5 // pred_check
      %p646 = pneg %p645
    $region38: #{double_conv.5} parent=5 // pred_check_branch
      %648 = sbr.rel (%p646) target = $region40
    $region39: #{double_conv.5} parent=5 // pred_region
      %s649 = ssub.s32 %s9, 2
      // Predicated region
      $region41: #{double_conv.5} parent=39 // pred_check
        %p650 = pneg %p122
      $region42: #{double_conv.5} parent=39 // pred_check_branch
        %652 = sbr.rel (%p650) target = $region44
      $region43: #{double_conv.5} parent=39 // pred_region
        %s653 = smul.u32 8, %s21
        %p654 = scmp.lt.s32.totalorder %s20, 1
        %s655 = scalar_select %p654, %s20, 1
        %p656 = scmp.lt.s32.totalorder %s653, 15
        %s657 = scalar_select %p656, %s653, 15
        %s658 = smul.addr %s657, 3
        %s659 = smul.addr %s655, 48
        %s660 = sadd.s32 %s658, %s659
        %s661 = smul.addr %s660, 4
        %s662 = scalar_lea.vmem %s3, %s661
      $region44: #{double_conv.5} parent=39 // pred_fallthru
        _
    $region40: #{double_conv.5} parent=5 // pred_fallthru
      _
  $region6: #{double_conv.5} parent=0 // loop_footer
    %s13 = sadd.s32 1, %s9
  $region7: #{double_conv.5} parent=0 // loop_footer_branch
    %8 = sbr.rel target = $region3
  $region8: #{double_conv.5} parent=0 // loop_exit
    _

// kernel: double_conv.4
$region0: #{double_conv.4}
  #allocation0 [shape = 'u32[]', space=smem, size = 0x4, offset = 0x4, fixed_abs, tag = 'smem constant byte address 0x4 - core index']
  #allocation1 [shape = 'u32[144,128]{1,0:T(1,128)}', space=vmem, size = 0x12000, scoped, tag = 'internal scratch']
  %s0 = inlined_call_operand.vmem [shape: bf16[2,16,18,128], index: 0, kind: input, shape index: {}]
  %s1 = inlined_call_operand.vmem [shape: bf16[2,2,2,18,128], index: 1, kind: input, shape index: {}]
  %s2 = inlined_call_operand.vmem [shape: bf16[1152,128], index: 2, kind: input, shape index: {}]
  %s3 = inlined_call_operand.vmem [shape: bf16[2,16,16,128], index: 3, kind: output, shape index: {0}]
  %s4 = inlined_call_operand.vmem [shape: f32[2,2,1,128], index: 4, kind: output, shape index: {1}]
  %s5 = inlined_call_operand.vmem [shape: f32[2,2,1,128], index: 5, kind: output, shape index: {2}]
  %6 = xla_tuple %s3, %s4, %s5
  %s7 = sld [smem:[#allocation0]]
  $region61: #{double_conv.4} parent=0
    _
  %s9 = ssub.s32 1, %s7
  %s10 = scalar_select 0, %s9, %s7
  loop: start=0, step=1, limit=6
  $region2: #{double_conv.4} parent=0 // loop_pre_header
    _
  $region3: #{double_conv.4} parent=0 // loop_header
    %s12 = sphi 0, %s16
    %p13 = scmp.ge.s32.totalorder %s12, 6
    %s19 = sphi 0, %s31
    %s20 = sphi 0, %s27
    %s21 = sphi 0, %s19
    %s22 = sphi 0, %s20
    %s23 = sphi 0, %s21
    %s24 = sphi 0, %s22
    %s36 = sphi 0, %s38
    %s39 = sphi 0, %s36
    %s40 = sphi 0, %s39
    %s56 = sphi 0, %s40
    %s64 = sphi 0, %s66
    %s67 = sphi 0, %s64
    %s68 = sphi 0, %s67
    %s84 = sphi 0, %s68
    %s88 = sphi 0, %s88
    %s90 = sphi 0, %s88
    %s91 = sphi 0, %s90
    %s105 = sphi 0, %s91
    %s113 = sphi 0, %s115
    %s116 = sphi 0, %s113
    %s117 = sphi 0, %s116
    %s133 = sphi 0, %s117
    %s141 = sphi 0, %s143
    %s144 = sphi 0, %s141
    %s145 = sphi 0, %s144
    %s161 = sphi 0, %s145
    %s169 = sphi 0, %s171
    %s172 = sphi 0, %s169
    %s173 = sphi 0, %s172
    %s189 = sphi 0, %s173
  $region4: #{double_conv.4} parent=0 // loop_header_branch
    %15 = sbr.rel (%p13) target = $region8
  $region5: #{double_conv.4} parent=0 // loop_body
    %s17 = ssub.s32 %s12, 1
    %s18 = ssub.s32 %s12, 2
    %s25 = sadd.s32 1, %s20
    %p26 = scmp.ge.s32.totalorder %s25, 2
    %s27 = scalar_select %p26, 0, %s25
    %s28 = sadd.s32 1, %s19
    %s29 = scalar_select %p26, %s28, %s19
    %p30 = scmp.ge.s32.totalorder %s29, 2
    %s31 = scalar_select %p30, 0, %s29
    %s32 = ssub.s32 %s19, %s31
    %s33 = ssub.s32 %s20, %s27
    %s34 = sor.u32 %s32, %s33
    %p35 = scmp.eq.s32.totalorder %s34, 0
    %s37 = sadd.s32 %s36, 1
    %s38 = scalar_select %p35, %s36, %s37
    %p41 = pneg %p35
    %p42 = scmp.eq.s32.totalorder %s12, 3
    %p43 = por %p41, %p42
    %p44 = scmp.ne.s32.totalorder %s36, %s39
    %p45 = scmp.eq.s32.totalorder %s12, 0
    %p46 = por %p44, %p45
    %p47 = scmp.ne.s32.totalorder %s36, %s39
    %p48 = scmp.eq.s32.totalorder %s17, 3
    %p49 = por %p47, %p48
    %p50 = scmp.ne.s32.totalorder %s39, %s40
    %p51 = scmp.eq.s32.totalorder %s17, 0
    %p52 = por %p50, %p51
    %p53 = scmp.ne.s32.totalorder %s39, %s40
    %p54 = scmp.eq.s32.totalorder %s18, 3
    %p55 = por %p53, %p54
    %p57 = scmp.ne.s32.totalorder %s40, %s56
    %p58 = scmp.eq.s32.totalorder %s18, 0
    %p59 = por %p57, %p58
    %s60 = ssub.s32 %s19, %s31
    %s61 = ssub.s32 %s20, %s27
    %s62 = sor.u32 %s60, %s61
    %p63 = scmp.eq.s32.totalorder %s62, 0
    %s65 = sadd.s32 %s64, 1
    %s66 = scalar_select %p63, %s64, %s65
    %p69 = pneg %p63
    %p70 = scmp.eq.s32.totalorder %s12, 3
    %p71 = por %p69, %p70
    %p72 = scmp.ne.s32.totalorder %s64, %s67
    %p73 = scmp.eq.s32.totalorder %s12, 0
    %p74 = por %p72, %p73
    %p75 = scmp.ne.s32.totalorder %s64, %s67
    %p76 = scmp.eq.s32.totalorder %s17, 3
    %p77 = por %p75, %p76
    %p78 = scmp.ne.s32.totalorder %s67, %s68
    %p79 = scmp.eq.s32.totalorder %s17, 0
    %p80 = por %p78, %p79
    %p81 = scmp.ne.s32.totalorder %s67, %s68
    %p82 = scmp.eq.s32.totalorder %s18, 3
    %p83 = por %p81, %p82
    %p85 = scmp.ne.s32.totalorder %s68, %s84
    %p86 = scmp.eq.s32.totalorder %s18, 0
    %p87 = por %p85, %p86
    %s89 = sadd.s32 %s88, 1
    %p92 = scmp.eq.s32.totalorder %s12, 3
    %p93 = scmp.ne.s32.totalorder %s88, %s90
    %p94 = scmp.eq.s32.totalorder %s12, 0
    %p95 = por %p93, %p94
    %p96 = scmp.ne.s32.totalorder %s88, %s90
    %p97 = scmp.eq.s32.totalorder %s17, 3
    %p98 = por %p96, %p97
    %p99 = scmp.ne.s32.totalorder %s90, %s91
    %p100 = scmp.eq.s32.totalorder %s17, 0
    %p101 = por %p99, %p100
    %p102 = scmp.ne.s32.totalorder %s90, %s91
    %p103 = scmp.eq.s32.totalorder %s18, 3
    %p104 = por %p102, %p103
    %p106 = scmp.ne.s32.totalorder %s91, %s105
    %p107 = scmp.eq.s32.totalorder %s18, 0
    %p108 = por %p106, %p107
    %s109 = ssub.s32 %s19, %s31
    %s110 = ssub.s32 %s20, %s27
    %s111 = sor.u32 %s109, %s110
    %p112 = scmp.eq.s32.totalorder %s111, 0
    %s114 = sadd.s32 %s113, 1
    %s115 = scalar_select %p112, %s113, %s114
    %p118 = pneg %p112
    %p119 = scmp.eq.s32.totalorder %s12, 3
    %p120 = por %p118, %p119
    %p121 = scmp.ne.s32.totalorder %s113, %s116
    %p122 = scmp.eq.s32.totalorder %s12, 0
    %p123 = por %p121, %p122
    %p124 = scmp.ne.s32.totalorder %s113, %s116
    %p125 = scmp.eq.s32.totalorder %s17, 3
    %p126 = por %p124, %p125
    %p127 = scmp.ne.s32.totalorder %s116, %s117
    %p128 = scmp.eq.s32.totalorder %s17, 0
    %p129 = por %p127, %p128
    %p130 = scmp.ne.s32.totalorder %s116, %s117
    %p131 = scmp.eq.s32.totalorder %s18, 3
    %p132 = por %p130, %p131
    %p134 = scmp.ne.s32.totalorder %s117, %s133
    %p135 = scmp.eq.s32.totalorder %s18, 0
    %p136 = por %p134, %p135
    %s137 = ssub.s32 %s19, %s31
    %s138 = ssub.s32 %s20, %s27
    %s139 = sor.u32 %s137, %s138
    %p140 = scmp.eq.s32.totalorder %s139, 0
    %s142 = sadd.s32 %s141, 1
    %s143 = scalar_select %p140, %s141, %s142
    %p146 = pneg %p140
    %p147 = scmp.eq.s32.totalorder %s12, 3
    %p148 = por %p146, %p147
    %p149 = scmp.ne.s32.totalorder %s141, %s144
    %p150 = scmp.eq.s32.totalorder %s12, 0
    %p151 = por %p149, %p150
    %p152 = scmp.ne.s32.totalorder %s141, %s144
    %p153 = scmp.eq.s32.totalorder %s17, 3
    %p154 = por %p152, %p153
    %p155 = scmp.ne.s32.totalorder %s144, %s145
    %p156 = scmp.eq.s32.totalorder %s17, 0
    %p157 = por %p155, %p156
    %p158 = scmp.ne.s32.totalorder %s144, %s145
    %p159 = scmp.eq.s32.totalorder %s18, 3
    %p160 = por %p158, %p159
    %p162 = scmp.ne.s32.totalorder %s145, %s161
    %p163 = scmp.eq.s32.totalorder %s18, 0
    %p164 = por %p162, %p163
    %s165 = ssub.s32 %s19, %s31
    %s166 = ssub.s32 %s20, %s27
    %s167 = sor.u32 %s165, %s166
    %p168 = scmp.eq.s32.totalorder %s167, 0
    %s170 = sadd.s32 %s169, 1
    %s171 = scalar_select %p168, %s169, %s170
    %p174 = pneg %p168
    %p175 = scmp.eq.s32.totalorder %s12, 3
    %p176 = por %p174, %p175
    %p177 = scmp.ne.s32.totalorder %s169, %s172
    %p178 = scmp.eq.s32.totalorder %s12, 0
    %p179 = por %p177, %p178
    %p180 = scmp.ne.s32.totalorder %s169, %s172
    %p181 = scmp.eq.s32.totalorder %s17, 3
    %p182 = por %p180, %p181
    %p183 = scmp.ne.s32.totalorder %s172, %s173
    %p184 = scmp.eq.s32.totalorder %s17, 0
    %p185 = por %p183, %p184
    %p186 = scmp.ne.s32.totalorder %s172, %s173
    %p187 = scmp.eq.s32.totalorder %s18, 3
    %p188 = por %p186, %p187
    %p190 = scmp.ne.s32.totalorder %s173, %s189
    %p191 = scmp.eq.s32.totalorder %s18, 0
    %p192 = por %p190, %p191
    %p193 = scmp.le.s32.totalorder 1, %s12
    %p194 = scmp.lt.s32.totalorder %s12, 5
    %p195 = pnand %p193, %p194
    %p196 = pneg %p195
    // Predicated region
    $region9: #{double_conv.4} parent=5 // pred_check
      _
    $region10: #{double_conv.4} parent=5 // pred_check_branch
      %198 = sbr.rel (%p195) target = $region12
    $region11: #{double_conv.4} parent=5 // pred_region
      %s199 = ssub.s32 %s12, 1
      // Predicated region
      $region13: #{double_conv.4} parent=11 // pred_check
        %p200 = pneg %p101
      $region14: #{double_conv.4} parent=11 // pred_check_branch
        %202 = sbr.rel (%p200) target = $region16
      $region15: #{double_conv.4} parent=11 // pred_region
        _
      $region16: #{double_conv.4} parent=11 // pred_fallthru
        _
    $region12: #{double_conv.4} parent=5 // pred_fallthru
      _
    %p203 = scmp.lt.s32.totalorder %s12, 4
    // Predicated region
    $region17: #{double_conv.4} parent=5 // pred_check
      %p204 = pneg %p203
    $region18: #{double_conv.4} parent=5 // pred_check_branch
      %206 = sbr.rel (%p204) target = $region20
    $region19: #{double_conv.4} parent=5 // pred_region
      // Predicated region
      $region21: #{double_conv.4} parent=19 // pred_check
        %p207 = pneg %p46
      $region22: #{double_conv.4} parent=19 // pred_check_branch
        %209 = sbr.rel (%p207) target = $region24
      $region23: #{double_conv.4} parent=19 // pred_region
        %s210 = smul.u32 8, %s20
        %p211 = scmp.lt.s32.totalorder %s19, 1
        %s212 = scalar_select %p211, %s19, 1
        %p213 = scmp.lt.s32.totalorder %s210, 15
        %s214 = scalar_select %p213, %s210, 15
        %s215 = smul.addr %s214, 3
        %s216 = smul.addr %s212, 48
        %s217 = sadd.s32 %s215, %s216
        %s218 = smul.addr %s217, 4
        %s219 = scalar_lea.vmem %s0, %s218
        %s220 = smul.u32 8, %s20
      $region24: #{double_conv.4} parent=19 // pred_fallthru
        _
      // Predicated region
      $region25: #{double_conv.4} parent=19 // pred_check
        %p221 = pneg %p74
      $region26: #{double_conv.4} parent=19 // pred_check_branch
        %223 = sbr.rel (%p221) target = $region28
      $region27: #{double_conv.4} parent=19 // pred_region
        %p224 = scmp.lt.s32.totalorder %s19, 1
        %s225 = scalar_select %p224, %s19, 1
        %p226 = scmp.lt.s32.totalorder %s20, 1
        %s227 = scalar_select %p226, %s20, 1
        %s228 = smul.addr %s227, 6
        %s229 = smul.addr %s225, 12
        %s230 = sadd.s32 %s228, %s229
        %s231 = smul.addr %s230, 4
        %s232 = scalar_lea.vmem %s1, %s231
      $region28: #{double_conv.4} parent=19 // pred_fallthru
        _
    $region20: #{double_conv.4} parent=5 // pred_fallthru
      _
    %p233 = scmp.le.s32.totalorder 1, %s12
    %p234 = scmp.lt.s32.totalorder %s12, 5
    %p235 = pnand %p233, %p234
    %p236 = pneg %p235
    // Predicated region
    $region29: #{double_conv.4} parent=5 // pred_check
      _
    $region30: #{double_conv.4} parent=5 // pred_check_branch
      %238 = sbr.rel (%p235) target = $region32
    $region31: #{double_conv.4} parent=5 // pred_region
      %s239 = ssub.s32 %s12, 1
      %s240 = smul.u32 8, %s22
      %p241 = scmp.lt.s32.totalorder %s21, 1
      %s242 = scalar_select %p241, %s21, 1
      %p243 = scmp.lt.s32.totalorder %s240, 15
      %s244 = scalar_select %p243, %s240, 15
      %s245 = smul.addr %s244, 3
      %s246 = smul.addr %s242, 48
      %s247 = sadd.s32 %s245, %s246
      %s248 = smul.addr %s247, 4
      %s249 = scalar_lea.vmem %s0, %s248
      %p250 = pneg %p52
      %p251 = pneg %p49
      %p252 = scmp.lt.s32.totalorder %s21, 1
      %s253 = scalar_select %p252, %s21, 1
      %p254 = scmp.lt.s32.totalorder %s22, 1
      %s255 = scalar_select %p254, %s22, 1
      %s256 = smul.addr %s255, 6
      %s257 = smul.addr %s253, 12
      %s258 = sadd.s32 %s256, %s257
      %s259 = smul.addr %s258, 4
      %s260 = scalar_lea.vmem %s1, %s259
      %p261 = pneg %p80
      %p262 = pneg %p77
      %p263 = pneg %p101
      %p264 = pneg %p98
      %p265 = pneg %p129
      %p266 = pneg %p126
      %s267 = smul.u32 8, %s22
      %p268 = scmp.lt.s32.totalorder %s21, 1
      %s269 = scalar_select %p268, %s21, 1
      %p270 = scmp.lt.s32.totalorder %s267, 15
      %s271 = scalar_select %p270, %s267, 15
      %s272 = smul.addr %s271, 2
      %s273 = smul.addr %s269, 32
      %s274 = sadd.s32 %s272, %s273
      %s275 = smul.addr %s274, 4
      %s276 = scalar_lea.vmem %s3, %s275
      %p277 = pneg %p157
      %p278 = pneg %p154
      %p279 = scmp.lt.s32.totalorder %s21, 1
      %s280 = scalar_select %p279, %s21, 1
      %p281 = scmp.lt.s32.totalorder %s22, 1
      %s282 = scalar_select %p281, %s22, 1
      %s283 = smul.addr %s280, 2
      %s284 = sadd.s32 %s282, %s283
      %s285 = scalar_lea.vmem %s4, %s284
      %p286 = pneg %p185
      %p287 = pneg %p182
      %p288 = scmp.lt.s32.totalorder %s21, 1
      %s289 = scalar_select %p288, %s21, 1
      %p290 = scmp.lt.s32.totalorder %s22, 1
      %s291 = scalar_select %p290, %s22, 1
      %s292 = smul.addr %s289, 2
      %s293 = sadd.s32 %s291, %s292
      %s294 = scalar_lea.vmem %s5, %s293
      %s295 = smul.u32 8, %s22
      %p296 = scmp.lt.s32.totalorder %s21, 1
      %s297 = scalar_select %p296, %s21, 1
      %p298 = scmp.lt.s32.totalorder %s295, 15
      %s299 = scalar_select %p298, %s295, 15
      %s300 = smul.addr %s299, 3
      %s301 = smul.addr %s297, 48
      %s302 = sadd.s32 %s300, %s301
      %s303 = smul.addr %s302, 4
      %s304 = scalar_lea.vmem %s0, %s303
      %s305 = smul.u32 8, %s22
      %p306 = scmp.lt.s32.totalorder %s21, 1
      %s307 = scalar_select %p306, %s21, 1
      %p308 = scmp.lt.s32.totalorder %s22, 1
      %s309 = scalar_select %p308, %s22, 1
      %s310 = smul.addr %s309, 6
      %s311 = smul.addr %s307, 12
      %s312 = sadd.s32 %s310, %s311
      %s313 = smul.addr %s312, 4
      %s314 = scalar_lea.vmem %s1, %s313
      %s315 = smul.u32 8, %s22
      %p316 = scmp.lt.s32.totalorder %s21, 1
      %s317 = scalar_select %p316, %s21, 1
      %p318 = scmp.lt.s32.totalorder %s315, 15
      %s319 = scalar_select %p318, %s315, 15
      %s320 = smul.addr %s319, 2
      %s321 = smul.addr %s317, 32
      %s322 = sadd.s32 %s320, %s321
      %s323 = smul.addr %s322, 4
      %s324 = scalar_lea.vmem %s3, %s323
      %s325 = smul.u32 8, %s22
      %p326 = scmp.lt.s32.totalorder %s21, 1
      %s327 = scalar_select %p326, %s21, 1
      %p328 = scmp.lt.s32.totalorder %s22, 1
      %s329 = scalar_select %p328, %s22, 1
      %s330 = smul.addr %s327, 2
      %s331 = sadd.s32 %s329, %s330
      %s332 = scalar_lea.vmem %s4, %s331
      %p333 = scmp.lt.s32.totalorder %s21, 1
      %s334 = scalar_select %p333, %s21, 1
      %p335 = scmp.lt.s32.totalorder %s22, 1
      %s336 = scalar_select %p335, %s22, 1
      %s337 = smul.addr %s334, 2
      %s338 = sadd.s32 %s336, %s337
      %s339 = scalar_lea.vmem %s5, %s338
      %v341 = vld [vmem:[%s314] sm:$0xf]
      %v342 = vld [vmem:[%s314 + $0x4] sm:$0xf]
      %v343 = vld [vmem:[%s314 + $0x8] sm:$0x1]
      %v344 = vld [vmem:[%s314 + $0xc] sm:$0xf]
      %v345 = vld [vmem:[%s314 + $0x10] sm:$0xf]
      %v346 = vld [vmem:[%s314 + $0x14] sm:$0x1]
      %v347 = vld [vmem:[%s304] sm:$0xf]
      %v348 = vld [vmem:[%s304 + $0x4] sm:$0xf]
      %v349 = vld [vmem:[%s304 + $0x8] sm:$0x1]
      %v350 = vld [vmem:[%s304 + $0xc] sm:$0xf]
      %v351 = vld [vmem:[%s304 + $0x10] sm:$0xf]
      %v352 = vld [vmem:[%s304 + $0x14] sm:$0x1]
      %v353 = vld [vmem:[%s304 + $0x18] sm:$0xf]
      %v354 = vld [vmem:[%s304 + $0x1c] sm:$0xf]
      %v355 = vld [vmem:[%s304 + $0x20] sm:$0x1]
      %v356 = vld [vmem:[%s304 + $0x24] sm:$0xf]
      %v357 = vld [vmem:[%s304 + $0x28] sm:$0xf]
      %v358 = vld [vmem:[%s304 + $0x2c] sm:$0x1]
      %v359 = vld [vmem:[%s304 + $0x30] sm:$0xf]
      %v360 = vld [vmem:[%s304 + $0x34] sm:$0xf]
      %v361 = vld [vmem:[%s304 + $0x38] sm:$0x1]
      %v362 = vld [vmem:[%s304 + $0x3c] sm:$0xf]
      %v363 = vld [vmem:[%s304 + $0x40] sm:$0xf]
      %v364 = vld [vmem:[%s304 + $0x44] sm:$0x1]
      %v365 = vld [vmem:[%s304 + $0x48] sm:$0xf]
      %v366 = vld [vmem:[%s304 + $0x4c] sm:$0xf]
      %v367 = vld [vmem:[%s304 + $0x50] sm:$0x1]
      %v368 = vld [vmem:[%s304 + $0x54] sm:$0xf]
      %v369 = vld [vmem:[%s304 + $0x58] sm:$0xf]
      %v370 = vld [vmem:[%s304 + $0x5c] sm:$0x1]
      %v387 = vunpack.c.l.b16 %v341
      %v388 = vunpack.c.l.b16 %v342
      %v389 = vunpack.c.l.b16 %v347
      %v390 = vunpack.c.l.b16 %v348
      %v391 = vunpack.c.l.b16 %v350
      %v392 = vunpack.c.l.b16 %v351
      %v393 = vunpack.c.l.b16 %v353
      %v394 = vunpack.c.l.b16 %v354
      %v395 = vunpack.c.l.b16 %v356
      %v396 = vunpack.c.l.b16 %v357
      %v397 = vunpack.c.l.b16 %v359
      %v398 = vunpack.c.l.b16 %v360
      %v399 = vunpack.c.l.b16 %v362
      %v400 = vunpack.c.l.b16 %v363
      %v401 = vunpack.c.l.b16 %v365
      %v402 = vunpack.c.l.b16 %v366
      %v403 = vpack.c.b16 %v388, %v387
      %v404 = vpack.c.b16 %v390, %v389
      %v405 = vpack.c.b16 %v392, %v391
      %v406 = vpack.c.b16 %v394, %v393
      %v407 = vpack.c.b16 %v396, %v395
      %v408 = vpack.c.b16 %v398, %v397
      %v409 = vpack.c.b16 %v400, %v399
      %v410 = vpack.c.b16 %v402, %v401
      %v427 = vunpack.c.l.b16 %v343
      %v428 = vunpack.c.l.b16 %v349
      %v429 = vunpack.c.l.b16 %v352
      %v430 = vunpack.c.l.b16 %v355
      %v431 = vunpack.c.l.b16 %v358
      %v432 = vunpack.c.l.b16 %v361
      %v433 = vunpack.c.l.b16 %v364
      %v434 = vunpack.c.l.b16 %v367
      %v435 = vpack.c.b16 %v427, %v427
      %v436 = vpack.c.b16 %v428, %v428
      %v437 = vpack.c.b16 %v429, %v429
      %v438 = vpack.c.b16 %v430, %v430
      %v439 = vpack.c.b16 %v431, %v431
      %v440 = vpack.c.b16 %v432, %v432
      %v441 = vpack.c.b16 %v433, %v433
      %v442 = vpack.c.b16 %v434, %v434
      %vm443 = vsmask.f32 7424
      %v445 = vshrl.u32 %v403, 16
      %v447 = vshll.u32 %v403, 16
      %v449 = vrot.slane %v447, 1
      %v450 = vor.u32 %v445, %v449
      %v452 = vshll.u32 %v435, 16
      %v454 = vrot.slane %v452, 1
      %v455 = vsel %vm443, %v450, %v454
      %v457 = vshrl.u32 %v404, 16
      %v459 = vshll.u32 %v404, 16
      %v461 = vrot.slane %v459, 1
      %v462 = vor.u32 %v457, %v461
      %v464 = vshll.u32 %v436, 16
      %v466 = vrot.slane %v464, 1
      %v467 = vsel %vm443, %v462, %v466
      %v469 = vshrl.u32 %v405, 16
      %v471 = vshll.u32 %v405, 16
      %v473 = vrot.slane %v471, 1
      %v474 = vor.u32 %v469, %v473
      %v476 = vshll.u32 %v437, 16
      %v478 = vrot.slane %v476, 1
      %v479 = vsel %vm443, %v474, %v478
      %v481 = vshrl.u32 %v406, 16
      %v483 = vshll.u32 %v406, 16
      %v485 = vrot.slane %v483, 1
      %v486 = vor.u32 %v481, %v485
      %v488 = vshll.u32 %v438, 16
      %v490 = vrot.slane %v488, 1
      %v491 = vsel %vm443, %v486, %v490
      %v493 = vshrl.u32 %v407, 16
      %v495 = vshll.u32 %v407, 16
      %v497 = vrot.slane %v495, 1
      %v498 = vor.u32 %v493, %v497
      %v500 = vshll.u32 %v439, 16
      %v502 = vrot.slane %v500, 1
      %v503 = vsel %vm443, %v498, %v502
      %v505 = vshrl.u32 %v408, 16
      %v507 = vshll.u32 %v408, 16
      %v509 = vrot.slane %v507, 1
      %v510 = vor.u32 %v505, %v509
      %v512 = vshll.u32 %v440, 16
      %v514 = vrot.slane %v512, 1
      %v515 = vsel %vm443, %v510, %v514
      %v517 = vshrl.u32 %v409, 16
      %v519 = vshll.u32 %v409, 16
      %v521 = vrot.slane %v519, 1
      %v522 = vor.u32 %v517, %v521
      %v524 = vshll.u32 %v441, 16
      %v526 = vrot.slane %v524, 1
      %v527 = vsel %vm443, %v522, %v526
      %v529 = vshrl.u32 %v410, 16
      %v531 = vshll.u32 %v410, 16
      %v533 = vrot.slane %v531, 1
      %v534 = vor.u32 %v529, %v533
      %v536 = vshll.u32 %v442, 16
      %v538 = vrot.slane %v536, 1
      %v539 = vsel %vm443, %v534, %v538
      %vm548 = vcmask 1046528
      %v549 = vrot.slane %v403, 1
      %v550 = vrot.slane %v435, 1
      %v551 = vsel %vm548, %v549, %v550
      %v552 = vrot.slane %v404, 1
      %v553 = vrot.slane %v436, 1
      %v554 = vsel %vm548, %v552, %v553
      %v555 = vrot.slane %v405, 1
      %v556 = vrot.slane %v437, 1
      %v557 = vsel %vm548, %v555, %v556
      %v558 = vrot.slane %v406, 1
      %v559 = vrot.slane %v438, 1
      %v560 = vsel %vm548, %v558, %v559
      %v561 = vrot.slane %v407, 1
      %v562 = vrot.slane %v439, 1
      %v563 = vsel %vm548, %v561, %v562
      %v564 = vrot.slane %v408, 1
      %v565 = vrot.slane %v440, 1
      %v566 = vsel %vm548, %v564, %v565
      %v567 = vrot.slane %v409, 1
      %v568 = vrot.slane %v441, 1
      %v569 = vsel %vm548, %v567, %v568
      %v570 = vrot.slane %v410, 1
      %v571 = vrot.slane %v442, 1
      %v572 = vsel %vm548, %v570, %v571
      %v583 = vunpack.c.l.b16 %v368
      %v584 = vunpack.c.l.b16 %v369
      %v585 = vpack.c.b16 %v584, %v583
      %v588 = vunpack.c.l.b16 %v370
      %v589 = vpack.c.b16 %v588, %v588
      %v591 = vshrl.u32 %v585, 16
      %v593 = vshll.u32 %v585, 16
      %v595 = vrot.slane %v593, 1
      %v596 = vor.u32 %v591, %v595
      %v598 = vshll.u32 %v589, 16
      %v600 = vrot.slane %v598, 1
      %v601 = vsel %vm443, %v596, %v600
      %v603 = vrot.slane %v585, 1
      %v604 = vrot.slane %v589, 1
      %v605 = vsel %vm548, %v603, %v604
      %v609 = vunpack.c.l.b16 %v344
      %v610 = vunpack.c.l.b16 %v345
      %v611 = vpack.c.b16 %v610, %v609
      %v614 = vunpack.c.l.b16 %v346
      %v615 = vpack.c.b16 %v614, %v614
      %v617 = vshrl.u32 %v611, 16
      %v619 = vshll.u32 %v611, 16
      %v621 = vrot.slane %v619, 1
      %v622 = vor.u32 %v617, %v621
      %v624 = vshll.u32 %v615, 16
      %v626 = vrot.slane %v624, 1
      %v627 = vsel %vm443, %v622, %v626
      %v629 = vrot.slane %v611, 1
      %v630 = vrot.slane %v615, 1
      %v631 = vsel %vm548, %v629, %v630
      %v633 = vld [vmem:[%s2] sm:$0xf]
      %v634 = vld [vmem:[%s2 + $0x4] sm:$0xf]
      %v635 = vld [vmem:[%s2 + $0x8] sm:$0xf]
      %v636 = vld [vmem:[%s2 + $0xc] sm:$0xf]
      %v637 = vld [vmem:[%s2 + $0x10] sm:$0xf]
      %v638 = vld [vmem:[%s2 + $0x14] sm:$0xf]
      %v639 = vld [vmem:[%s2 + $0x18] sm:$0xf]
      %v640 = vld [vmem:[%s2 + $0x1c] sm:$0xf]
      %v641 = vld [vmem:[%s2 + $0x20] sm:$0xf]
      %v642 = vld [vmem:[%s2 + $0x24] sm:$0xf]
      %v643 = vld [vmem:[%s2 + $0x28] sm:$0xf]
      %v644 = vld [vmem:[%s2 + $0x2c] sm:$0xf]
      %v645 = vld [vmem:[%s2 + $0x30] sm:$0xf]
      %v646 = vld [vmem:[%s2 + $0x34] sm:$0xf]
      %v647 = vld [vmem:[%s2 + $0x38] sm:$0xf]
      %v648 = vld [vmem:[%s2 + $0x3c] sm:$0xf]
      %v649 = vld [vmem:[%s2 + $0x40] sm:$0xf]
      %v650 = vld [vmem:[%s2 + $0x44] sm:$0xf]
      %v651 = vld [vmem:[%s2 + $0x48] sm:$0xf]
      %v652 = vld [vmem:[%s2 + $0x4c] sm:$0xf]
      %v653 = vld [vmem:[%s2 + $0x50] sm:$0xf]
      %v654 = vld [vmem:[%s2 + $0x54] sm:$0xf]
      %v655 = vld [vmem:[%s2 + $0x58] sm:$0xf]
      %v656 = vld [vmem:[%s2 + $0x5c] sm:$0xf]
      %v657 = vld [vmem:[%s2 + $0x60] sm:$0xf]
      %v658 = vld [vmem:[%s2 + $0x64] sm:$0xf]
      %v659 = vld [vmem:[%s2 + $0x68] sm:$0xf]
      %v660 = vld [vmem:[%s2 + $0x6c] sm:$0xf]
      %v661 = vld [vmem:[%s2 + $0x70] sm:$0xf]
      %v662 = vld [vmem:[%s2 + $0x74] sm:$0xf]
      %v663 = vld [vmem:[%s2 + $0x78] sm:$0xf]
      %v664 = vld [vmem:[%s2 + $0x7c] sm:$0xf]
      %v665 = vld [vmem:[%s2 + $0x80] sm:$0xf]
      %v666 = vld [vmem:[%s2 + $0x84] sm:$0xf]
      %v667 = vld [vmem:[%s2 + $0x88] sm:$0xf]
      %v668 = vld [vmem:[%s2 + $0x8c] sm:$0xf]
      %v669 = vld [vmem:[%s2 + $0x90] sm:$0xf]
      %v670 = vld [vmem:[%s2 + $0x94] sm:$0xf]
      %v671 = vld [vmem:[%s2 + $0x98] sm:$0xf]
      %v672 = vld [vmem:[%s2 + $0x9c] sm:$0xf]
      %v673 = vld [vmem:[%s2 + $0xa0] sm:$0xf]
      %v674 = vld [vmem:[%s2 + $0xa4] sm:$0xf]
      %v675 = vld [vmem:[%s2 + $0xa8] sm:$0xf]
      %v676 = vld [vmem:[%s2 + $0xac] sm:$0xf]
      %v677 = vld [vmem:[%s2 + $0xb0] sm:$0xf]
      %v678 = vld [vmem:[%s2 + $0xb4] sm:$0xf]
      %v679 = vld [vmem:[%s2 + $0xb8] sm:$0xf]
      %v680 = vld [vmem:[%s2 + $0xbc] sm:$0xf]
      %v681 = vld [vmem:[%s2 + $0xc0] sm:$0xf]
      %v682 = vld [vmem:[%s2 + $0xc4] sm:$0xf]
      %v683 = vld [vmem:[%s2 + $0xc8] sm:$0xf]
      %v684 = vld [vmem:[%s2 + $0xcc] sm:$0xf]
      %v685 = vld [vmem:[%s2 + $0xd0] sm:$0xf]
      %v686 = vld [vmem:[%s2 + $0xd4] sm:$0xf]
      %v687 = vld [vmem:[%s2 + $0xd8] sm:$0xf]
      %v688 = vld [vmem:[%s2 + $0xdc] sm:$0xf]
      %v689 = vld [vmem:[%s2 + $0xe0] sm:$0xf]
      %v690 = vld [vmem:[%s2 + $0xe4] sm:$0xf]
      %v691 = vld [vmem:[%s2 + $0xe8] sm:$0xf]
      %v692 = vld [vmem:[%s2 + $0xec] sm:$0xf]
      %v693 = vld [vmem:[%s2 + $0xf0] sm:$0xf]
      %v694 = vld [vmem:[%s2 + $0xf4] sm:$0xf]
      %v695 = vld [vmem:[%s2 + $0xf8] sm:$0xf]
      %v696 = vld [vmem:[%s2 + $0xfc] sm:$0xf]
      %v697 = vld [vmem:[%s2 + $0x100] sm:$0xf]
      %v698 = vld [vmem:[%s2 + $0x104] sm:$0xf]
      %v699 = vld [vmem:[%s2 + $0x108] sm:$0xf]
      %v700 = vld [vmem:[%s2 + $0x10c] sm:$0xf]
      %v701 = vld [vmem:[%s2 + $0x110] sm:$0xf]
      %v702 = vld [vmem:[%s2 + $0x114] sm:$0xf]
      %v703 = vld [vmem:[%s2 + $0x118] sm:$0xf]
      %v704 = vld [vmem:[%s2 + $0x11c] sm:$0xf]
      %v705 = vld [vmem:[%s2 + $0x120] sm:$0xf]
      %v706 = vld [vmem:[%s2 + $0x124] sm:$0xf]
      %v707 = vld [vmem:[%s2 + $0x128] sm:$0xf]
      %v708 = vld [vmem:[%s2 + $0x12c] sm:$0xf]
      %v709 = vld [vmem:[%s2 + $0x130] sm:$0xf]
      %v710 = vld [vmem:[%s2 + $0x134] sm:$0xf]
      %v711 = vld [vmem:[%s2 + $0x138] sm:$0xf]
      %v712 = vld [vmem:[%s2 + $0x13c] sm:$0xf]
      %v713 = vld [vmem:[%s2 + $0x140] sm:$0xf]
      %v714 = vld [vmem:[%s2 + $0x144] sm:$0xf]
      %v715 = vld [vmem:[%s2 + $0x148] sm:$0xf]
      %v716 = vld [vmem:[%s2 + $0x14c] sm:$0xf]
      %v717 = vld [vmem:[%s2 + $0x150] sm:$0xf]
      %v718 = vld [vmem:[%s2 + $0x154] sm:$0xf]
      %v719 = vld [vmem:[%s2 + $0x158] sm:$0xf]
      %v720 = vld [vmem:[%s2 + $0x15c] sm:$0xf]
      %v721 = vld [vmem:[%s2 + $0x160] sm:$0xf]
      %v722 = vld [vmem:[%s2 + $0x164] sm:$0xf]
      %v723 = vld [vmem:[%s2 + $0x168] sm:$0xf]
      %v724 = vld [vmem:[%s2 + $0x16c] sm:$0xf]
      %v725 = vld [vmem:[%s2 + $0x170] sm:$0xf]
      %v726 = vld [vmem:[%s2 + $0x174] sm:$0xf]
      %v727 = vld [vmem:[%s2 + $0x178] sm:$0xf]
      %v728 = vld [vmem:[%s2 + $0x17c] sm:$0xf]
      %v729 = vld [vmem:[%s2 + $0x180] sm:$0xf]
      %v730 = vld [vmem:[%s2 + $0x184] sm:$0xf]
      %v731 = vld [vmem:[%s2 + $0x188] sm:$0xf]
      %v732 = vld [vmem:[%s2 + $0x18c] sm:$0xf]
      %v733 = vld [vmem:[%s2 + $0x190] sm:$0xf]
      %v734 = vld [vmem:[%s2 + $0x194] sm:$0xf]
      %v735 = vld [vmem:[%s2 + $0x198] sm:$0xf]
      %v736 = vld [vmem:[%s2 + $0x19c] sm:$0xf]
      %v737 = vld [vmem:[%s2 + $0x1a0] sm:$0xf]
      %v738 = vld [vmem:[%s2 + $0x1a4] sm:$0xf]
      %v739 = vld [vmem:[%s2 + $0x1a8] sm:$0xf]
      %v740 = vld [vmem:[%s2 + $0x1ac] sm:$0xf]
      %v741 = vld [vmem:[%s2 + $0x1b0] sm:$0xf]
      %v742 = vld [vmem:[%s2 + $0x1b4] sm:$0xf]
      %v743 = vld [vmem:[%s2 + $0x1b8] sm:$0xf]
      %v744 = vld [vmem:[%s2 + $0x1bc] sm:$0xf]
      %v745 = vld [vmem:[%s2 + $0x1c0] sm:$0xf]
      %v746 = vld [vmem:[%s2 + $0x1c4] sm:$0xf]
      %v747 = vld [vmem:[%s2 + $0x1c8] sm:$0xf]
      %v748 = vld [vmem:[%s2 + $0x1cc] sm:$0xf]
      %v749 = vld [vmem:[%s2 + $0x1d0] sm:$0xf]
      %v750 = vld [vmem:[%s2 + $0x1d4] sm:$0xf]
      %v751 = vld [vmem:[%s2 + $0x1d8] sm:$0xf]
      %v752 = vld [vmem:[%s2 + $0x1dc] sm:$0xf]
      %v753 = vld [vmem:[%s2 + $0x1e0] sm:$0xf]
      %v754 = vld [vmem:[%s2 + $0x1e4] sm:$0xf]
      %v755 = vld [vmem:[%s2 + $0x1e8] sm:$0xf]
      %v756 = vld [vmem:[%s2 + $0x1ec] sm:$0xf]
      %v757 = vld [vmem:[%s2 + $0x1f0] sm:$0xf]
      %v758 = vld [vmem:[%s2 + $0x1f4] sm:$0xf]
      %v759 = vld [vmem:[%s2 + $0x1f8] sm:$0xf]
      %v760 = vld [vmem:[%s2 + $0x1fc] sm:$0xf]
      %v761 = vld [vmem:[%s2 + $0x200] sm:$0xf]
      %v762 = vld [vmem:[%s2 + $0x204] sm:$0xf]
      %v763 = vld [vmem:[%s2 + $0x208] sm:$0xf]
      %v764 = vld [vmem:[%s2 + $0x20c] sm:$0xf]
      %v765 = vld [vmem:[%s2 + $0x210] sm:$0xf]
      %v766 = vld [vmem:[%s2 + $0x214] sm:$0xf]
      %v767 = vld [vmem:[%s2 + $0x218] sm:$0xf]
      %v768 = vld [vmem:[%s2 + $0x21c] sm:$0xf]
      %v769 = vld [vmem:[%s2 + $0x220] sm:$0xf]
      %v770 = vld [vmem:[%s2 + $0x224] sm:$0xf]
      %v771 = vld [vmem:[%s2 + $0x228] sm:$0xf]
      %v772 = vld [vmem:[%s2 + $0x22c] sm:$0xf]
      %v773 = vld [vmem:[%s2 + $0x230] sm:$0xf]
      %v774 = vld [vmem:[%s2 + $0x234] sm:$0xf]
      %v775 = vld [vmem:[%s2 + $0x238] sm:$0xf]
      %v776 = vld [vmem:[%s2 + $0x23c] sm:$0xf]
      %v921 = vunpack.c.l.b16 %v633
      %v922 = vunpack.c.l.b16 %v634
      %v923 = vunpack.c.l.b16 %v635
      %v924 = vunpack.c.l.b16 %v636
      %v925 = vunpack.c.l.b16 %v637
      %v926 = vunpack.c.l.b16 %v638
      %v927 = vunpack.c.l.b16 %v639
      %v928 = vunpack.c.l.b16 %v640
      %v929 = vunpack.c.l.b16 %v641
      %v930 = vunpack.c.l.b16 %v642
      %v931 = vunpack.c.l.b16 %v643
      %v932 = vunpack.c.l.b16 %v644
      %v933 = vunpack.c.l.b16 %v645
      %v934 = vunpack.c.l.b16 %v646
      %v935 = vunpack.c.l.b16 %v647
      %v936 = vunpack.c.l.b16 %v648
      %v937 = vunpack.c.l.b16 %v649
      %v938 = vunpack.c.l.b16 %v650
      %v939 = vunpack.c.l.b16 %v651
      %v940 = vunpack.c.l.b16 %v652
      %v941 = vunpack.c.l.b16 %v653
      %v942 = vunpack.c.l.b16 %v654
      %v943 = vunpack.c.l.b16 %v655
      %v944 = vunpack.c.l.b16 %v656
      %v945 = vunpack.c.l.b16 %v657
      %v946 = vunpack.c.l.b16 %v658
      %v947 = vunpack.c.l.b16 %v659
      %v948 = vunpack.c.l.b16 %v660
      %v949 = vunpack.c.l.b16 %v661
      %v950 = vunpack.c.l.b16 %v662
      %v951 = vunpack.c.l.b16 %v663
      %v952 = vunpack.c.l.b16 %v664
      %v953 = vunpack.c.l.b16 %v665
      %v954 = vunpack.c.l.b16 %v666
      %v955 = vunpack.c.l.b16 %v667
      %v956 = vunpack.c.l.b16 %v668
      %v957 = vunpack.c.l.b16 %v669
      %v958 = vunpack.c.l.b16 %v670
      %v959 = vunpack.c.l.b16 %v671
      %v960 = vunpack.c.l.b16 %v672
      %v961 = vunpack.c.l.b16 %v673
      %v962 = vunpack.c.l.b16 %v674
      %v963 = vunpack.c.l.b16 %v675
      %v964 = vunpack.c.l.b16 %v676
      %v965 = vunpack.c.l.b16 %v677
      %v966 = vunpack.c.l.b16 %v678
      %v967 = vunpack.c.l.b16 %v679
      %v968 = vunpack.c.l.b16 %v680
      %v969 = vunpack.c.l.b16 %v681
      %v970 = vunpack.c.l.b16 %v682
      %v971 = vunpack.c.l.b16 %v683
      %v972 = vunpack.c.l.b16 %v684
      %v973 = vunpack.c.l.b16 %v685
      %v974 = vunpack.c.l.b16 %v686
      %v975 = vunpack.c.l.b16 %v687
      %v976 = vunpack.c.l.b16 %v688
      %v977 = vunpack.c.l.b16 %v689
      %v978 = vunpack.c.l.b16 %v690
      %v979 = vunpack.c.l.b16 %v691
      %v980 = vunpack.c.l.b16 %v692
      %v981 = vunpack.c.l.b16 %v693
      %v982 = vunpack.c.l.b16 %v694
      %v983 = vunpack.c.l.b16 %v695
      %v984 = vunpack.c.l.b16 %v696
      %v985 = vunpack.c.l.b16 %v697
      %v986 = vunpack.c.l.b16 %v698
      %v987 = vunpack.c.l.b16 %v699
      %v988 = vunpack.c.l.b16 %v700
      %v989 = vunpack.c.l.b16 %v701
      %v990 = vunpack.c.l.b16 %v702
      %v991 = vunpack.c.l.b16 %v703
      %v992 = vunpack.c.l.b16 %v704
      %v993 = vunpack.c.l.b16 %v705
      %v994 = vunpack.c.l.b16 %v706
      %v995 = vunpack.c.l.b16 %v707
      %v996 = vunpack.c.l.b16 %v708
      %v997 = vunpack.c.l.b16 %v709
      %v998 = vunpack.c.l.b16 %v710
      %v999 = vunpack.c.l.b16 %v711
      %v1000 = vunpack.c.l.b16 %v712
      %v1001 = vunpack.c.l.b16 %v713
      %v1002 = vunpack.c.l.b16 %v714
      %v1003 = vunpack.c.l.b16 %v715
      %v1004 = vunpack.c.l.b16 %v716
      %v1005 = vunpack.c.l.b16 %v717
      %v1006 = vunpack.c.l.b16 %v718
      %v1007 = vunpack.c.l.b16 %v719
      %v1008 = vunpack.c.l.b16 %v720
      %v1009 = vunpack.c.l.b16 %v721
      %v1010 = vunpack.c.l.b16 %v722
      %v1011 = vunpack.c.l.b16 %v723
      %v1012 = vunpack.c.l.b16 %v724
      %v1013 = vunpack.c.l.b16 %v725
      %v1014 = vunpack.c.l.b16 %v726
      %v1015 = vunpack.c.l.b16 %v727
      %v1016 = vunpack.c.l.b16 %v728
      %v1017 = vunpack.c.l.b16 %v729
      %v1018 = vunpack.c.l.b16 %v730
      %v1019 = vunpack.c.l.b16 %v731
      %v1020 = vunpack.c.l.b16 %v732
      %v1021 = vunpack.c.l.b16 %v733
      %v1022 = vunpack.c.l.b16 %v734
      %v1023 = vunpack.c.l.b16 %v735
      %v1024 = vunpack.c.l.b16 %v736
      %v1025 = vunpack.c.l.b16 %v737
      %v1026 = vunpack.c.l.b16 %v738
      %v1027 = vunpack.c.l.b16 %v739
      %v1028 = vunpack.c.l.b16 %v740
      %v1029 = vunpack.c.l.b16 %v741
      %v1030 = vunpack.c.l.b16 %v742
      %v1031 = vunpack.c.l.b16 %v743
      %v1032 = vunpack.c.l.b16 %v744
      %v1033 = vunpack.c.l.b16 %v745
      %v1034 = vunpack.c.l.b16 %v746
      %v1035 = vunpack.c.l.b16 %v747
      %v1036 = vunpack.c.l.b16 %v748
      %v1037 = vunpack.c.l.b16 %v749
      %v1038 = vunpack.c.l.b16 %v750
      %v1039 = vunpack.c.l.b16 %v751
      %v1040 = vunpack.c.l.b16 %v752
      %v1041 = vunpack.c.l.b16 %v753
      %v1042 = vunpack.c.l.b16 %v754
      %v1043 = vunpack.c.l.b16 %v755
      %v1044 = vunpack.c.l.b16 %v756
      %v1045 = vunpack.c.l.b16 %v757
      %v1046 = vunpack.c.l.b16 %v758
      %v1047 = vunpack.c.l.b16 %v759
      %v1048 = vunpack.c.l.b16 %v760
      %v1049 = vunpack.c.l.b16 %v761
      %v1050 = vunpack.c.l.b16 %v762
      %v1051 = vunpack.c.l.b16 %v763
      %v1052 = vunpack.c.l.b16 %v764
      %v1053 = vunpack.c.l.b16 %v765
      %v1054 = vunpack.c.l.b16 %v766
      %v1055 = vunpack.c.l.b16 %v767
      %v1056 = vunpack.c.l.b16 %v768
      %v1057 = vunpack.c.l.b16 %v769
      %v1058 = vunpack.c.l.b16 %v770
      %v1059 = vunpack.c.l.b16 %v771
      %v1060 = vunpack.c.l.b16 %v772
      %v1061 = vunpack.c.l.b16 %v773
      %v1062 = vunpack.c.l.b16 %v774
      %v1063 = vunpack.c.l.b16 %v775
      %v1064 = vunpack.c.l.b16 %v776
      %v1065 = vpack.c.b16 %v922, %v921
      %v1066 = vpack.c.b16 %v924, %v923
      %v1067 = vpack.c.b16 %v926, %v925
      %v1068 = vpack.c.b16 %v928, %v927
      %v1069 = vpack.c.b16 %v930, %v929
      %v1070 = vpack.c.b16 %v932, %v931
      %v1071 = vpack.c.b16 %v934, %v933
      %v1072 = vpack.c.b16 %v936, %v935
      %v1073 = vpack.c.b16 %v938, %v937
      %v1074 = vpack.c.b16 %v940, %v939
      %v1075 = vpack.c.b16 %v942, %v941
      %v1076 = vpack.c.b16 %v944, %v943
      %v1077 = vpack.c.b16 %v946, %v945
      %v1078 = vpack.c.b16 %v948, %v947
      %v1079 = vpack.c.b16 %v950, %v949
      %v1080 = vpack.c.b16 %v952, %v951
      %v1081 = vpack.c.b16 %v954, %v953
      %v1082 = vpack.c.b16 %v956, %v955
      %v1083 = vpack.c.b16 %v958, %v957
      %v1084 = vpack.c.b16 %v960, %v959
      %v1085 = vpack.c.b16 %v962, %v961
      %v1086 = vpack.c.b16 %v964, %v963
      %v1087 = vpack.c.b16 %v966, %v965
      %v1088 = vpack.c.b16 %v968, %v967
      %v1089 = vpack.c.b16 %v970, %v969
      %v1090 = vpack.c.b16 %v972, %v971
      %v1091 = vpack.c.b16 %v974, %v973
      %v1092 = vpack.c.b16 %v976, %v975
      %v1093 = vpack.c.b16 %v978, %v977
      %v1094 = vpack.c.b16 %v980, %v979
      %v1095 = vpack.c.b16 %v982, %v981
      %v1096 = vpack.c.b16 %v984, %v983
      %v1097 = vpack.c.b16 %v986, %v985
      %v1098 = vpack.c.b16 %v988, %v987
      %v1099 = vpack.c.b16 %v990, %v989
      %v1100 = vpack.c.b16 %v992, %v991
      %v1101 = vpack.c.b16 %v994, %v993
      %v1102 = vpack.c.b16 %v996, %v995
      %v1103 = vpack.c.b16 %v998, %v997
      %v1104 = vpack.c.b16 %v1000, %v999
      %v1105 = vpack.c.b16 %v1002, %v1001
      %v1106 = vpack.c.b16 %v1004, %v1003
      %v1107 = vpack.c.b16 %v1006, %v1005
      %v1108 = vpack.c.b16 %v1008, %v1007
      %v1109 = vpack.c.b16 %v1010, %v1009
      %v1110 = vpack.c.b16 %v1012, %v1011
      %v1111 = vpack.c.b16 %v1014, %v1013
      %v1112 = vpack.c.b16 %v1016, %v1015
      %v1113 = vpack.c.b16 %v1018, %v1017
      %v1114 = vpack.c.b16 %v1020, %v1019
      %v1115 = vpack.c.b16 %v1022, %v1021
      %v1116 = vpack.c.b16 %v1024, %v1023
      %v1117 = vpack.c.b16 %v1026, %v1025
      %v1118 = vpack.c.b16 %v1028, %v1027
      %v1119 = vpack.c.b16 %v1030, %v1029
      %v1120 = vpack.c.b16 %v1032, %v1031
      %v1121 = vpack.c.b16 %v1034, %v1033
      %v1122 = vpack.c.b16 %v1036, %v1035
      %v1123 = vpack.c.b16 %v1038, %v1037
      %v1124 = vpack.c.b16 %v1040, %v1039
      %v1125 = vpack.c.b16 %v1042, %v1041
      %v1126 = vpack.c.b16 %v1044, %v1043
      %v1127 = vpack.c.b16 %v1046, %v1045
      %v1128 = vpack.c.b16 %v1048, %v1047
      %v1129 = vpack.c.b16 %v1050, %v1049
      %v1130 = vpack.c.b16 %v1052, %v1051
      %v1131 = vpack.c.b16 %v1054, %v1053
      %v1132 = vpack.c.b16 %v1056, %v1055
      %v1133 = vpack.c.b16 %v1058, %v1057
      %v1134 = vpack.c.b16 %v1060, %v1059
      %v1135 = vpack.c.b16 %v1062, %v1061
      %v1136 = vpack.c.b16 %v1064, %v1063
      %1209 = vmatprep.subr.bf16.mxu0 0
      %1210 = vmatpush1.bf16.msra.mxu0 %v1065
      %1211 = vmatprep.subr.bf16.mxu0 0
      %1212 = vmatpush1.bf16.msra.mxu0 %v1066
      %1213 = vmatprep.subr.bf16.mxu0 0
      %1214 = vmatpush1.bf16.msra.mxu0 %v1067
      %1215 = vmatprep.subr.bf16.mxu0 0
      %1216 = vmatpush1.bf16.msra.mxu0 %v1068
      %1217 = vmatprep.subr.bf16.mxu0 0
      %1218 = vmatpush1.bf16.msra.mxu0 %v1069
      %1219 = vmatprep.subr.bf16.mxu0 0
      %1220 = vmatpush1.bf16.msra.mxu0 %v1070
      %1221 = vmatprep.subr.bf16.mxu0 0
      %1222 = vmatpush1.bf16.msra.mxu0 %v1071
      %1223 = vmatprep.subr.bf16.mxu0 0
      %1224 = vmatpush1.bf16.msra.mxu0 %v1072
      %1225 = vmatprep.subr.bf16.mxu0 0
      %1226 = vmatpush1.bf16.msra.mxu0 %v1073
      %1227 = vmatprep.subr.bf16.mxu0 0
      %1228 = vmatpush1.bf16.msra.mxu0 %v1074
      %1229 = vmatprep.subr.bf16.mxu0 0
      %1230 = vmatpush1.bf16.msra.mxu0 %v1075
      %1231 = vmatprep.subr.bf16.mxu0 0
      %1232 = vmatpush1.bf16.msra.mxu0 %v1076
      %1233 = vmatprep.subr.bf16.mxu0 0
      %1234 = vmatpush1.bf16.msra.mxu0 %v1077
      %1235 = vmatprep.subr.bf16.mxu0 0
      %1236 = vmatpush1.bf16.msra.mxu0 %v1078
      %1237 = vmatprep.subr.bf16.mxu0 0
      %1238 = vmatpush1.bf16.msra.mxu0 %v1079
      %1239 = vmatprep.subr.bf16.mxu0 0
      %1240 = vmatpush1.bf16.msra.mxu0 %v1080
      %1241 = vmatprep.mubr.bf16.mxu0 %v455
      %1242 = vmatmul.mubr.bf16.gmra.mrb[0].mxu0 %v403
      %v1243 = vpop.f32.mrb[0].mxu0
      %v1244 = vadd.f32 0.0, %v1243
      %v1245 = vpop.f32.mrb[0].mxu0
      %v1246 = vpop.f32.mrb[0].mxu0
      %v1247 = vadd.f32 0.0, %v1246
      %v1248 = vpop.f32.mrb[0].mxu0
      %1249 = vmatprep.mubr.bf16.mxu0 %v467
      %1250 = vmatmul.mubr.bf16.gmra.mrb[0].mxu0 %v404
      %v1251 = vpop.f32.mrb[0].mxu0
      %v1252 = vadd.f32 0.0, %v1251
      %v1253 = vpop.f32.mrb[0].mxu0
      %v1254 = vpop.f32.mrb[0].mxu0
      %v1255 = vadd.f32 0.0, %v1254
      %v1256 = vpop.f32.mrb[0].mxu0
      %1257 = vmatprep.mubr.bf16.mxu0 %v479
      %1258 = vmatmul.mubr.bf16.gmra.mrb[0].mxu0 %v405
      %v1259 = vpop.f32.mrb[0].mxu0
      %v1260 = vadd.f32 0.0, %v1259
      %v1261 = vpop.f32.mrb[0].mxu0
      %v1262 = vpop.f32.mrb[0].mxu0
      %v1263 = vadd.f32 0.0, %v1262
      %v1264 = vpop.f32.mrb[0].mxu0
      %1265 = vmatprep.mubr.bf16.mxu0 %v491
      %1266 = vmatmul.mubr.bf16.gmra.mrb[0].mxu0 %v406
      %v1267 = vpop.f32.mrb[0].mxu0
      %v1268 = vadd.f32 0.0, %v1267
      %v1269 = vpop.f32.mrb[0].mxu0
      %v1270 = vpop.f32.mrb[0].mxu0
      %v1271 = vadd.f32 0.0, %v1270
      %v1272 = vpop.f32.mrb[0].mxu0
      %1273 = vmatprep.mubr.bf16.mxu0 %v503
      %1274 = vmatmul.mubr.bf16.gmra.mrb[0].mxu0 %v407
      %v1275 = vpop.f32.mrb[0].mxu0
      %v1276 = vadd.f32 0.0, %v1275
      %v1277 = vpop.f32.mrb[0].mxu0
      %v1278 = vpop.f32.mrb[0].mxu0
      %v1279 = vadd.f32 0.0, %v1278
      %v1280 = vpop.f32.mrb[0].mxu0
      %1281 = vmatprep.mubr.bf16.mxu0 %v515
      %1282 = vmatmul.mubr.bf16.gmra.mrb[0].mxu0 %v408
      %v1283 = vpop.f32.mrb[0].mxu0
      %v1284 = vadd.f32 0.0, %v1283
      %v1285 = vpop.f32.mrb[0].mxu0
      %v1286 = vpop.f32.mrb[0].mxu0
      %v1287 = vadd.f32 0.0, %v1286
      %v1288 = vpop.f32.mrb[0].mxu0
      %1289 = vmatprep.mubr.bf16.mxu0 %v527
      %1290 = vmatmul.mubr.bf16.gmra.mrb[0].mxu0 %v409
      %v1291 = vpop.f32.mrb[0].mxu0
      %v1292 = vadd.f32 0.0, %v1291
      %v1293 = vpop.f32.mrb[0].mxu0
      %v1294 = vpop.f32.mrb[0].mxu0
      %v1295 = vadd.f32 0.0, %v1294
      %v1296 = vpop.f32.mrb[0].mxu0
      %1297 = vmatprep.mubr.bf16.mxu0 %v539
      %1298 = vmatmul.mubr.bf16.gmra.mrb[0].mxu0 %v410
      %v1299 = vpop.f32.mrb[0].mxu0
      %v1300 = vadd.f32 0.0, %v1299
      %v1301 = vpop.f32.mrb[0].mxu0
      %v1302 = vpop.f32.mrb[0].mxu0
      %v1303 = vadd.f32 0.0, %v1302
      %v1304 = vpop.f32.mrb[0].mxu0
      %1305 = vdwg.mxu0
      %1306 = vmatprep.subr.bf16.mxu0 0
      %1307 = vmatpush1.bf16.msra.mxu0 %v1081
      %1308 = vmatprep.subr.bf16.mxu0 0
      %1309 = vmatpush1.bf16.msra.mxu0 %v1082
      %1310 = vmatprep.subr.bf16.mxu0 0
      %1311 = vmatpush1.bf16.msra.mxu0 %v1083
      %1312 = vmatprep.subr.bf16.mxu0 0
      %1313 = vmatpush1.bf16.msra.mxu0 %v1084
      %1314 = vmatprep.subr.bf16.mxu0 0
      %1315 = vmatpush1.bf16.msra.mxu0 %v1085
      %1316 = vmatprep.subr.bf16.mxu0 0
      %1317 = vmatpush1.bf16.msra.mxu0 %v1086
      %1318 = vmatprep.subr.bf16.mxu0 0
      %1319 = vmatpush1.bf16.msra.mxu0 %v1087
      %1320 = vmatprep.subr.bf16.mxu0 0
      %1321 = vmatpush1.bf16.msra.mxu0 %v1088
      %1322 = vmatprep.subr.bf16.mxu0 0
      %1323 = vmatpush1.bf16.msra.mxu0 %v1089
      %1324 = vmatprep.subr.bf16.mxu0 0
      %1325 = vmatpush1.bf16.msra.mxu0 %v1090
      %1326 = vmatprep.subr.bf16.mxu0 0
      %1327 = vmatpush1.bf16.msra.mxu0 %v1091
      %1328 = vmatprep.subr.bf16.mxu0 0
      %1329 = vmatpush1.bf16.msra.mxu0 %v1092
      %1330 = vmatprep.subr.bf16.mxu0 0
      %1331 = vmatpush1.bf16.msra.mxu0 %v1093
      %1332 = vmatprep.subr.bf16.mxu0 0
      %1333 = vmatpush1.bf16.msra.mxu0 %v1094
      %1334 = vmatprep.subr.bf16.mxu0 0
      %1335 = vmatpush1.bf16.msra.mxu0 %v1095
      %1336 = vmatprep.subr.bf16.mxu0 0
      %1337 = vmatpush1.bf16.msra.mxu0 %v1096
      %1338 = vmatprep.mubr.bf16.mxu0 %v404
      %1339 = vmatmul.mubr.bf16.gmra.mrb[0].mxu0 %v551
      %v1340 = vpop.f32.mrb[0].mxu0
      %v1341 = vadd.f32 %v1244, %v1340
      %v1342 = vpop.f32.mrb[0].mxu0
      %v1343 = vpop.f32.mrb[0].mxu0
      %v1344 = vadd.f32 %v1247, %v1343
      %v1345 = vpop.f32.mrb[0].mxu0
      %1346 = vmatprep.mubr.bf16.mxu0 %v405
      %1347 = vmatmul.mubr.bf16.gmra.mrb[0].mxu0 %v554
      %v1348 = vpop.f32.mrb[0].mxu0
      %v1349 = vadd.f32 %v1252, %v1348
      %v1350 = vpop.f32.mrb[0].mxu0
      %v1351 = vpop.f32.mrb[0].mxu0
      %v1352 = vadd.f32 %v1255, %v1351
      %v1353 = vpop.f32.mrb[0].mxu0
      %1354 = vmatprep.mubr.bf16.mxu0 %v406
      %1355 = vmatmul.mubr.bf16.gmra.mrb[0].mxu0 %v557
      %v1356 = vpop.f32.mrb[0].mxu0
      %v1357 = vadd.f32 %v1260, %v1356
      %v1358 = vpop.f32.mrb[0].mxu0
      %v1359 = vpop.f32.mrb[0].mxu0
      %v1360 = vadd.f32 %v1263, %v1359
      %v1361 = vpop.f32.mrb[0].mxu0
      %1362 = vmatprep.mubr.bf16.mxu0 %v407
      %1363 = vmatmul.mubr.bf16.gmra.mrb[0].mxu0 %v560
      %v1364 = vpop.f32.mrb[0].mxu0
      %v1365 = vadd.f32 %v1268, %v1364
      %v1366 = vpop.f32.mrb[0].mxu0
      %v1367 = vpop.f32.mrb[0].mxu0
      %v1368 = vadd.f32 %v1271, %v1367
      %v1369 = vpop.f32.mrb[0].mxu0
      %1370 = vmatprep.mubr.bf16.mxu0 %v408
      %1371 = vmatmul.mubr.bf16.gmra.mrb[0].mxu0 %v563
      %v1372 = vpop.f32.mrb[0].mxu0
      %v1373 = vadd.f32 %v1276, %v1372
      %v1374 = vpop.f32.mrb[0].mxu0
      %v1375 = vpop.f32.mrb[0].mxu0
      %v1376 = vadd.f32 %v1279, %v1375
      %v1377 = vpop.f32.mrb[0].mxu0
      %1378 = vmatprep.mubr.bf16.mxu0 %v409
      %1379 = vmatmul.mubr.bf16.gmra.mrb[0].mxu0 %v566
      %v1380 = vpop.f32.mrb[0].mxu0
      %v1381 = vadd.f32 %v1284, %v1380
      %v1382 = vpop.f32.mrb[0].mxu0
      %v1383 = vpop.f32.mrb[0].mxu0
      %v1384 = vadd.f32 %v1287, %v1383
      %v1385 = vpop.f32.mrb[0].mxu0
      %1386 = vmatprep.mubr.bf16.mxu0 %v410
      %1387 = vmatmul.mubr.bf16.gmra.mrb[0].mxu0 %v569
      %v1388 = vpop.f32.mrb[0].mxu0
      %v1389 = vadd.f32 %v1292, %v1388
      %v1390 = vpop.f32.mrb[0].mxu0
      %v1391 = vpop.f32.mrb[0].mxu0
      %v1392 = vadd.f32 %v1295, %v1391
      %v1393 = vpop.f32.mrb[0].mxu0
      %1394 = vmatprep.mubr.bf16.mxu0 %v585
      %1395 = vmatmul.mubr.bf16.gmra.mrb[0].mxu0 %v572
      %v1396 = vpop.f32.mrb[0].mxu0
      %v1397 = vadd.f32 %v1300, %v1396
      %v1398 = vpop.f32.mrb[0].mxu0
      %v1399 = vpop.f32.mrb[0].mxu0
      %v1400 = vadd.f32 %v1303, %v1399
      %v1401 = vpop.f32.mrb[0].mxu0
      %1402 = vdwg.mxu0
      %1403 = vmatprep.subr.bf16.mxu0 0
      %1404 = vmatpush1.bf16.msra.mxu0 %v1097
      %1405 = vmatprep.subr.bf16.mxu0 0
      %1406 = vmatpush1.bf16.msra.mxu0 %v1098
      %1407 = vmatprep.subr.bf16.mxu0 0
      %1408 = vmatpush1.bf16.msra.mxu0 %v1099
      %1409 = vmatprep.subr.bf16.mxu0 0
      %1410 = vmatpush1.bf16.msra.mxu0 %v1100
      %1411 = vmatprep.subr.bf16.mxu0 0
      %1412 = vmatpush1.bf16.msra.mxu0 %v1101
      %1413 = vmatprep.subr.bf16.mxu0 0
      %1414 = vmatpush1.bf16.msra.mxu0 %v1102
      %1415 = vmatprep.subr.bf16.mxu0 0
      %1416 = vmatpush1.bf16.msra.mxu0 %v1103
      %1417 = vmatprep.subr.bf16.mxu0 0
      %1418 = vmatpush1.bf16.msra.mxu0 %v1104
      %1419 = vmatprep.subr.bf16.mxu0 0
      %1420 = vmatpush1.bf16.msra.mxu0 %v1105
      %1421 = vmatprep.subr.bf16.mxu0 0
      %1422 = vmatpush1.bf16.msra.mxu0 %v1106
      %1423 = vmatprep.subr.bf16.mxu0 0
      %1424 = vmatpush1.bf16.msra.mxu0 %v1107
      %1425 = vmatprep.subr.bf16.mxu0 0
      %1426 = vmatpush1.bf16.msra.mxu0 %v1108
      %1427 = vmatprep.subr.bf16.mxu0 0
      %1428 = vmatpush1.bf16.msra.mxu0 %v1109
      %1429 = vmatprep.subr.bf16.mxu0 0
      %1430 = vmatpush1.bf16.msra.mxu0 %v1110
      %1431 = vmatprep.subr.bf16.mxu0 0
      %1432 = vmatpush1.bf16.msra.mxu0 %v1111
      %1433 = vmatprep.subr.bf16.mxu0 0
      %1434 = vmatpush1.bf16.msra.mxu0 %v1112
      %1435 = vmatprep.mubr.bf16.mxu0 %v554
      %1436 = vmatmul.mubr.bf16.gmra.mrb[0].mxu0 %v467
      %v1437 = vpop.f32.mrb[0].mxu0
      %v1438 = vadd.f32 %v1341, %v1437
      %v1439 = vpop.f32.mrb[0].mxu0
      %v1440 = vpop.f32.mrb[0].mxu0
      %v1441 = vadd.f32 %v1344, %v1440
      %v1442 = vpop.f32.mrb[0].mxu0
      %1443 = vmatprep.mubr.bf16.mxu0 %v557
      %1444 = vmatmul.mubr.bf16.gmra.mrb[0].mxu0 %v479
      %v1445 = vpop.f32.mrb[0].mxu0
      %v1446 = vadd.f32 %v1349, %v1445
      %v1447 = vpop.f32.mrb[0].mxu0
      %v1448 = vpop.f32.mrb[0].mxu0
      %v1449 = vadd.f32 %v1352, %v1448
      %v1450 = vpop.f32.mrb[0].mxu0
      %1451 = vmatprep.mubr.bf16.mxu0 %v560
      %1452 = vmatmul.mubr.bf16.gmra.mrb[0].mxu0 %v491
      %v1453 = vpop.f32.mrb[0].mxu0
      %v1454 = vadd.f32 %v1357, %v1453
      %v1455 = vpop.f32.mrb[0].mxu0
      %v1456 = vpop.f32.mrb[0].mxu0
      %v1457 = vadd.f32 %v1360, %v1456
      %v1458 = vpop.f32.mrb[0].mxu0
      %1459 = vmatprep.mubr.bf16.mxu0 %v563
      %1460 = vmatmul.mubr.bf16.gmra.mrb[0].mxu0 %v503
      %v1461 = vpop.f32.mrb[0].mxu0
      %v1462 = vadd.f32 %v1365, %v1461
      %v1463 = vpop.f32.mrb[0].mxu0
      %v1464 = vpop.f32.mrb[0].mxu0
      %v1465 = vadd.f32 %v1368, %v1464
      %v1466 = vpop.f32.mrb[0].mxu0
      %1467 = vmatprep.mubr.bf16.mxu0 %v566
      %1468 = vmatmul.mubr.bf16.gmra.mrb[0].mxu0 %v515
      %v1469 = vpop.f32.mrb[0].mxu0
      %v1470 = vadd.f32 %v1373, %v1469
      %v1471 = vpop.f32.mrb[0].mxu0
      %v1472 = vpop.f32.mrb[0].mxu0
      %v1473 = vadd.f32 %v1376, %v1472
      %v1474 = vpop.f32.mrb[0].mxu0
      %1475 = vmatprep.mubr.bf16.mxu0 %v569
      %1476 = vmatmul.mubr.bf16.gmra.mrb[0].mxu0 %v527
      %v1477 = vpop.f32.mrb[0].mxu0
      %v1478 = vadd.f32 %v1381, %v1477
      %v1479 = vpop.f32.mrb[0].mxu0
      %v1480 = vpop.f32.mrb[0].mxu0
      %v1481 = vadd.f32 %v1384, %v1480
      %v1482 = vpop.f32.mrb[0].mxu0
      %1483 = vmatprep.mubr.bf16.mxu0 %v572
      %1484 = vmatmul.mubr.bf16.gmra.mrb[0].mxu0 %v539
      %v1485 = vpop.f32.mrb[0].mxu0
      %v1486 = vadd.f32 %v1389, %v1485
      %v1487 = vpop.f32.mrb[0].mxu0
      %v1488 = vpop.f32.mrb[0].mxu0
      %v1489 = vadd.f32 %v1392, %v1488
      %v1490 = vpop.f32.mrb[0].mxu0
      %1491 = vmatprep.mubr.bf16.mxu0 %v605
      %1492 = vmatmul.mubr.bf16.gmra.mrb[0].mxu0 %v601
      %v1493 = vpop.f32.mrb[0].mxu0
      %v1494 = vadd.f32 %v1397, %v1493
      %v1495 = vpop.f32.mrb[0].mxu0
      %v1496 = vpop.f32.mrb[0].mxu0
      %v1497 = vadd.f32 %v1400, %v1496
      %v1498 = vpop.f32.mrb[0].mxu0
      %1499 = vdwg.mxu0
      %1500 = vmatprep.subr.bf16.mxu0 0
      %1501 = vmatpush1.bf16.msra.mxu0 %v1113
      %1502 = vmatprep.subr.bf16.mxu0 0
      %1503 = vmatpush1.bf16.msra.mxu0 %v1114
      %1504 = vmatprep.subr.bf16.mxu0 0
      %1505 = vmatpush1.bf16.msra.mxu0 %v1115
      %1506 = vmatprep.subr.bf16.mxu0 0
      %1507 = vmatpush1.bf16.msra.mxu0 %v1116
      %1508 = vmatprep.subr.bf16.mxu0 0
      %1509 = vmatpush1.bf16.msra.mxu0 %v1117
      %1510 = vmatprep.subr.bf16.mxu0 0
      %1511 = vmatpush1.bf16.msra.mxu0 %v1118
      %1512 = vmatprep.subr.bf16.mxu0 0
      %1513 = vmatpush1.bf16.msra.mxu0 %v1119
      %1514 = vmatprep.subr.bf16.mxu0 0
      %1515 = vmatpush1.bf16.msra.mxu0 %v1120
      %1516 = vmatprep.subr.bf16.mxu0 0
      %1517 = vmatpush1.bf16.msra.mxu0 %v1121
      %1518 = vmatprep.subr.bf16.mxu0 0
      %1519 = vmatpush1.bf16.msra.mxu0 %v1122
      %1520 = vmatprep.subr.bf16.mxu0 0
      %1521 = vmatpush1.bf16.msra.mxu0 %v1123
      %1522 = vmatprep.subr.bf16.mxu0 0
      %1523 = vmatpush1.bf16.msra.mxu0 %v1124
      %1524 = vmatprep.subr.bf16.mxu0 0
      %1525 = vmatpush1.bf16.msra.mxu0 %v1125
      %1526 = vmatprep.subr.bf16.mxu0 0
      %1527 = vmatpush1.bf16.msra.mxu0 %v1126
      %1528 = vmatprep.subr.bf16.mxu0 0
      %1529 = vmatpush1.bf16.msra.mxu0 %v1127
      %1530 = vmatprep.subr.bf16.mxu0 0
      %1531 = vmatpush1.bf16.msra.mxu0 %v1128
      %1532 = vmatprep.mubr.bf16.mxu0 %v479
      %1533 = vmatmul.mubr.bf16.gmra.mrb[0].mxu0 %v405
      %v1534 = vpop.f32.mrb[0].mxu0
      %v1535 = vadd.f32 %v1438, %v1534
      %v1536 = vpop.f32.mrb[0].mxu0
      %v1537 = vpop.f32.mrb[0].mxu0
      %v1538 = vadd.f32 %v1441, %v1537
      %v1539 = vpop.f32.mrb[0].mxu0
      %1540 = vmatprep.mubr.bf16.mxu0 %v491
      %1541 = vmatmul.mubr.bf16.gmra.mrb[0].mxu0 %v406
      %v1542 = vpop.f32.mrb[0].mxu0
      %v1543 = vadd.f32 %v1446, %v1542
      %v1544 = vpop.f32.mrb[0].mxu0
      %v1545 = vpop.f32.mrb[0].mxu0
      %v1546 = vadd.f32 %v1449, %v1545
      %v1547 = vpop.f32.mrb[0].mxu0
      %1548 = vmatprep.mubr.bf16.mxu0 %v503
      %1549 = vmatmul.mubr.bf16.gmra.mrb[0].mxu0 %v407
      %v1550 = vpop.f32.mrb[0].mxu0
      %v1551 = vadd.f32 %v1454, %v1550
      %v1552 = vpop.f32.mrb[0].mxu0
      %v1553 = vpop.f32.mrb[0].mxu0
      %v1554 = vadd.f32 %v1457, %v1553
      %v1555 = vpop.f32.mrb[0].mxu0
      %1556 = vmatprep.mubr.bf16.mxu0 %v515
      %1557 = vmatmul.mubr.bf16.gmra.mrb[0].mxu0 %v408
      %v1558 = vpop.f32.mrb[0].mxu0
      %v1559 = vadd.f32 %v1462, %v1558
      %v1560 = vpop.f32.mrb[0].mxu0
      %v1561 = vpop.f32.mrb[0].mxu0
      %v1562 = vadd.f32 %v1465, %v1561
      %v1563 = vpop.f32.mrb[0].mxu0
      %1564 = vmatprep.mubr.bf16.mxu0 %v527
      %1565 = vmatmul.mubr.bf16.gmra.mrb[0].mxu0 %v409
      %v1566 = vpop.f32.mrb[0].mxu0
      %v1567 = vadd.f32 %v1470, %v1566
      %v1568 = vpop.f32.mrb[0].mxu0
      %v1569 = vpop.f32.mrb[0].mxu0
      %v1570 = vadd.f32 %v1473, %v1569
      %v1571 = vpop.f32.mrb[0].mxu0
      %1572 = vmatprep.mubr.bf16.mxu0 %v539
      %1573 = vmatmul.mubr.bf16.gmra.mrb[0].mxu0 %v410
      %v1574 = vpop.f32.mrb[0].mxu0
      %v1575 = vadd.f32 %v1478, %v1574
      %v1576 = vpop.f32.mrb[0].mxu0
      %v1577 = vpop.f32.mrb[0].mxu0
      %v1578 = vadd.f32 %v1481, %v1577
      %v1579 = vpop.f32.mrb[0].mxu0
      %1580 = vmatprep.mubr.bf16.mxu0 %v601
      %1581 = vmatmul.mubr.bf16.gmra.mrb[0].mxu0 %v585
      %v1582 = vpop.f32.mrb[0].mxu0
      %v1583 = vadd.f32 %v1486, %v1582
      %v1584 = vpop.f32.mrb[0].mxu0
      %v1585 = vpop.f32.mrb[0].mxu0
      %v1586 = vadd.f32 %v1489, %v1585
      %v1587 = vpop.f32.mrb[0].mxu0
      %1588 = vmatprep.mubr.bf16.mxu0 %v627
      %1589 = vmatmul.mubr.bf16.gmra.mrb[0].mxu0 %v611
      %v1590 = vpop.f32.mrb[0].mxu0
      %v1591 = vadd.f32 %v1494, %v1590
      %v1592 = vpop.f32.mrb[0].mxu0
      %v1593 = vpop.f32.mrb[0].mxu0
      %v1594 = vadd.f32 %v1497, %v1593
      %v1595 = vpop.f32.mrb[0].mxu0
      %1596 = vdwg.mxu0
      %1597 = vmatprep.subr.bf16.mxu0 0
      %1598 = vmatpush1.bf16.msra.mxu0 %v1129
      %1599 = vmatprep.subr.bf16.mxu0 0
      %1600 = vmatpush1.bf16.msra.mxu0 %v1130
      %1601 = vmatprep.subr.bf16.mxu0 0
      %1602 = vmatpush1.bf16.msra.mxu0 %v1131
      %1603 = vmatprep.subr.bf16.mxu0 0
      %1604 = vmatpush1.bf16.msra.mxu0 %v1132
      %1605 = vmatprep.subr.bf16.mxu0 0
      %1606 = vmatpush1.bf16.msra.mxu0 %v1133
      %1607 = vmatprep.subr.bf16.mxu0 0
      %1608 = vmatpush1.bf16.msra.mxu0 %v1134
      %1609 = vmatprep.subr.bf16.mxu0 0
      %1610 = vmatpush1.bf16.msra.mxu0 %v1135
      %1611 = vmatprep.subr.bf16.mxu0 0
      %1612 = vmatpush1.bf16.msra.mxu0 %v1136
      %1613 = vmatprep.subr.bf16.mxu0 0
      %1614 = vmatpush1.bf16.msra.mxu0 0
      %1615 = vmatprep.subr.bf16.mxu0 0
      %1616 = vmatpush1.bf16.msra.mxu0 0
      %1617 = vmatprep.subr.bf16.mxu0 0
      %1618 = vmatpush1.bf16.msra.mxu0 0
      %1619 = vmatprep.subr.bf16.mxu0 0
      %1620 = vmatpush1.bf16.msra.mxu0 0
      %1621 = vmatprep.subr.bf16.mxu0 0
      %1622 = vmatpush1.bf16.msra.mxu0 0
      %1623 = vmatprep.subr.bf16.mxu0 0
      %1624 = vmatpush1.bf16.msra.mxu0 0
      %1625 = vmatprep.subr.bf16.mxu0 0
      %1626 = vmatpush1.bf16.msra.mxu0 0
      %1627 = vmatprep.subr.bf16.mxu0 0
      %1628 = vmatpush1.bf16.msra.mxu0 0
      %1629 = vmatprep.mubr.bf16.mxu0 0
      %1630 = vmatmul.mubr.bf16.gmra.mrb[0].mxu0 %v557
      %v1631 = vpop.f32.mrb[0].mxu0
      %v1632 = vadd.f32 %v1535, %v1631
      %v1633 = vpop.f32.mrb[0].mxu0
      %v1634 = vpop.f32.mrb[0].mxu0
      %v1635 = vadd.f32 %v1538, %v1634
      %v1636 = vpop.f32.mrb[0].mxu0
      %1637 = vmatprep.mubr.bf16.mxu0 0
      %1638 = vmatmul.mubr.bf16.gmra.mrb[0].mxu0 %v560
      %v1639 = vpop.f32.mrb[0].mxu0
      %v1640 = vadd.f32 %v1543, %v1639
      %v1641 = vpop.f32.mrb[0].mxu0
      %v1642 = vpop.f32.mrb[0].mxu0
      %v1643 = vadd.f32 %v1546, %v1642
      %v1644 = vpop.f32.mrb[0].mxu0
      %1645 = vmatprep.mubr.bf16.mxu0 0
      %1646 = vmatmul.mubr.bf16.gmra.mrb[0].mxu0 %v563
      %v1647 = vpop.f32.mrb[0].mxu0
      %v1648 = vadd.f32 %v1551, %v1647
      %v1649 = vpop.f32.mrb[0].mxu0
      %v1650 = vpop.f32.mrb[0].mxu0
      %v1651 = vadd.f32 %v1554, %v1650
      %v1652 = vpop.f32.mrb[0].mxu0
      %1653 = vmatprep.mubr.bf16.mxu0 0
      %1654 = vmatmul.mubr.bf16.gmra.mrb[0].mxu0 %v566
      %v1655 = vpop.f32.mrb[0].mxu0
      %v1656 = vadd.f32 %v1559, %v1655
      %v1657 = vpop.f32.mrb[0].mxu0
      %v1658 = vpop.f32.mrb[0].mxu0
      %v1659 = vadd.f32 %v1562, %v1658
      %v1660 = vpop.f32.mrb[0].mxu0
      %1661 = vmatprep.mubr.bf16.mxu0 0
      %1662 = vmatmul.mubr.bf16.gmra.mrb[0].mxu0 %v569
      %v1663 = vpop.f32.mrb[0].mxu0
      %v1664 = vadd.f32 %v1567, %v1663
      %v1665 = vpop.f32.mrb[0].mxu0
      %v1666 = vpop.f32.mrb[0].mxu0
      %v1667 = vadd.f32 %v1570, %v1666
      %v1668 = vpop.f32.mrb[0].mxu0
      %1669 = vmatprep.mubr.bf16.mxu0 0
      %1670 = vmatmul.mubr.bf16.gmra.mrb[0].mxu0 %v572
      %v1671 = vpop.f32.mrb[0].mxu0
      %v1672 = vadd.f32 %v1575, %v1671
      %v1673 = vpop.f32.mrb[0].mxu0
      %v1674 = vpop.f32.mrb[0].mxu0
      %v1675 = vadd.f32 %v1578, %v1674
      %v1676 = vpop.f32.mrb[0].mxu0
      %1677 = vmatprep.mubr.bf16.mxu0 0
      %1678 = vmatmul.mubr.bf16.gmra.mrb[0].mxu0 %v605
      %v1679 = vpop.f32.mrb[0].mxu0
      %v1680 = vadd.f32 %v1583, %v1679
      %v1681 = vpop.f32.mrb[0].mxu0
      %v1682 = vpop.f32.mrb[0].mxu0
      %v1683 = vadd.f32 %v1586, %v1682
      %v1684 = vpop.f32.mrb[0].mxu0
      %1685 = vmatprep.mubr.bf16.mxu0 0
      %1686 = vmatmul.mubr.bf16.gmra.mrb[0].mxu0 %v631
      %v1687 = vpop.f32.mrb[0].mxu0
      %v1688 = vadd.f32 %v1591, %v1687
      %v1689 = vpop.f32.mrb[0].mxu0
      %v1690 = vpop.f32.mrb[0].mxu0
      %v1691 = vadd.f32 %v1594, %v1690
      %v1692 = vpop.f32.mrb[0].mxu0
      %1693 = vdwg.mxu0
      %v1694 = vpack.c.bf16 %v1635, %v1632
      %v1695 = vpack.c.bf16 %v1643, %v1640
      %v1696 = vpack.c.bf16 %v1651, %v1648
      %v1697 = vpack.c.bf16 %v1659, %v1656
      %v1698 = vpack.c.bf16 %v1667, %v1664
      %v1699 = vpack.c.bf16 %v1675, %v1672
      %v1700 = vpack.c.bf16 %v1683, %v1680
      %v1701 = vpack.c.bf16 %v1691, %v1688
      %v1710 = vunpack.c.l.b16 %v1694
      %v1711 = vunpack.c.h.b16 %v1694
      %v1712 = vunpack.c.l.b16 %v1695
      %v1713 = vunpack.c.h.b16 %v1695
      %v1714 = vunpack.c.l.b16 %v1696
      %v1715 = vunpack.c.h.b16 %v1696
      %v1716 = vunpack.c.l.b16 %v1697
      %v1717 = vunpack.c.h.b16 %v1697
      %v1718 = vunpack.c.l.b16 %v1698
      %v1719 = vunpack.c.h.b16 %v1698
      %v1720 = vunpack.c.l.b16 %v1699
      %v1721 = vunpack.c.h.b16 %v1699
      %v1722 = vunpack.c.l.b16 %v1700
      %v1723 = vunpack.c.h.b16 %v1700
      %v1724 = vunpack.c.l.b16 %v1701
      %v1725 = vunpack.c.h.b16 %v1701
      %v1726 = vpack.c.b16 %v1710, %v1710
      %v1727 = vpack.c.b16 %v1711, %v1711
      %v1728 = vpack.c.b16 %v1712, %v1712
      %v1729 = vpack.c.b16 %v1713, %v1713
      %v1730 = vpack.c.b16 %v1714, %v1714
      %v1731 = vpack.c.b16 %v1715, %v1715
      %v1732 = vpack.c.b16 %v1716, %v1716
      %v1733 = vpack.c.b16 %v1717, %v1717
      %v1734 = vpack.c.b16 %v1718, %v1718
      %v1735 = vpack.c.b16 %v1719, %v1719
      %v1736 = vpack.c.b16 %v1720, %v1720
      %v1737 = vpack.c.b16 %v1721, %v1721
      %v1738 = vpack.c.b16 %v1722, %v1722
      %v1739 = vpack.c.b16 %v1723, %v1723
      %v1740 = vpack.c.b16 %v1724, %v1724
      %v1741 = vpack.c.b16 %v1725, %v1725
      %1758 = vst [vmem:[%s324] sm:$0xf] %v1726
      %1759 = vst [vmem:[%s324 + $0x4] sm:$0xf] %v1727
      %1760 = vst [vmem:[%s324 + $0x8] sm:$0xf] %v1728
      %1761 = vst [vmem:[%s324 + $0xc] sm:$0xf] %v1729
      %1762 = vst [vmem:[%s324 + $0x10] sm:$0xf] %v1730
      %1763 = vst [vmem:[%s324 + $0x14] sm:$0xf] %v1731
      %1764 = vst [vmem:[%s324 + $0x18] sm:$0xf] %v1732
      %1765 = vst [vmem:[%s324 + $0x1c] sm:$0xf] %v1733
      %1766 = vst [vmem:[%s324 + $0x20] sm:$0xf] %v1734
      %1767 = vst [vmem:[%s324 + $0x24] sm:$0xf] %v1735
      %1768 = vst [vmem:[%s324 + $0x28] sm:$0xf] %v1736
      %1769 = vst [vmem:[%s324 + $0x2c] sm:$0xf] %v1737
      %1770 = vst [vmem:[%s324 + $0x30] sm:$0xf] %v1738
      %1771 = vst [vmem:[%s324 + $0x34] sm:$0xf] %v1739
      %1772 = vst [vmem:[%s324 + $0x38] sm:$0xf] %v1740
      %1773 = vst [vmem:[%s324 + $0x3c] sm:$0xf] %v1741
      %v1774 = vadd.f32 %v1632, %v1635
      %v1775 = vadd.f32 %v1774, %v1640
      %v1776 = vadd.f32 %v1775, %v1643
      %v1777 = vadd.f32 %v1776, %v1648
      %v1778 = vadd.f32 %v1777, %v1651
      %v1779 = vadd.f32 %v1778, %v1656
      %v1780 = vadd.f32 %v1779, %v1659
      %v1781 = vadd.f32 %v1780, %v1664
      %v1782 = vadd.f32 %v1781, %v1667
      %v1783 = vadd.f32 %v1782, %v1672
      %v1784 = vadd.f32 %v1783, %v1675
      %v1785 = vadd.f32 %v1784, %v1680
      %v1786 = vadd.f32 %v1785, %v1683
      %v1787 = vadd.f32 %v1786, %v1688
      %v1788 = vadd.f32 %v1787, %v1691
      %v1789 = vrot.slane %v1788, 4
      %v1790 = vadd.f32 %v1788, %v1789
      %v1791 = vrot.slane %v1790, 2
      %v1792 = vadd.f32 %v1790, %v1791
      %v1793 = vrot.slane %v1792, 1
      %v1794 = vadd.f32 %v1792, %v1793
      %1795 = vst [vmem:[%s332] sm:$0x1] %v1794
      %v1796 = vmul.f32 %v1632, %v1632
      %v1797 = vmul.f32 %v1635, %v1635
      %v1798 = vmul.f32 %v1640, %v1640
      %v1799 = vmul.f32 %v1643, %v1643
      %v1800 = vmul.f32 %v1648, %v1648
      %v1801 = vmul.f32 %v1651, %v1651
      %v1802 = vmul.f32 %v1656, %v1656
      %v1803 = vmul.f32 %v1659, %v1659
      %v1804 = vmul.f32 %v1664, %v1664
      %v1805 = vmul.f32 %v1667, %v1667
      %v1806 = vmul.f32 %v1672, %v1672
      %v1807 = vmul.f32 %v1675, %v1675
      %v1808 = vmul.f32 %v1680, %v1680
      %v1809 = vmul.f32 %v1683, %v1683
      %v1810 = vmul.f32 %v1688, %v1688
      %v1811 = vmul.f32 %v1691, %v1691
      %v1812 = vadd.f32 %v1796, %v1797
      %v1813 = vadd.f32 %v1812, %v1798
      %v1814 = vadd.f32 %v1813, %v1799
      %v1815 = vadd.f32 %v1814, %v1800
      %v1816 = vadd.f32 %v1815, %v1801
      %v1817 = vadd.f32 %v1816, %v1802
      %v1818 = vadd.f32 %v1817, %v1803
      %v1819 = vadd.f32 %v1818, %v1804
      %v1820 = vadd.f32 %v1819, %v1805
      %v1821 = vadd.f32 %v1820, %v1806
      %v1822 = vadd.f32 %v1821, %v1807
      %v1823 = vadd.f32 %v1822, %v1808
      %v1824 = vadd.f32 %v1823, %v1809
      %v1825 = vadd.f32 %v1824, %v1810
      %v1826 = vadd.f32 %v1825, %v1811
      %v1827 = vrot.slane %v1826, 4
      %v1828 = vadd.f32 %v1826, %v1827
      %v1829 = vrot.slane %v1828, 2
      %v1830 = vadd.f32 %v1828, %v1829
      %v1831 = vrot.slane %v1830, 1
      %v1832 = vadd.f32 %v1830, %v1831
      %1833 = vst [vmem:[%s339] sm:$0x1] %v1832
      %s1834 = smul.u32 8, %s22
      %p1835 = scmp.lt.s32.totalorder %s21, 1
      %s1836 = scalar_select %p1835, %s21, 1
      %p1837 = scmp.lt.s32.totalorder %s1834, 15
      %s1838 = scalar_select %p1837, %s1834, 15
      %s1839 = smul.addr %s1838, 2
      %s1840 = smul.addr %s1836, 32
      %s1841 = sadd.s32 %s1839, %s1840
      %s1842 = smul.addr %s1841, 4
      %s1843 = scalar_lea.vmem %s3, %s1842
      %p1844 = scmp.lt.s32.totalorder %s21, 1
      %s1845 = scalar_select %p1844, %s21, 1
      %p1846 = scmp.lt.s32.totalorder %s22, 1
      %s1847 = scalar_select %p1846, %s22, 1
      %s1848 = smul.addr %s1845, 2
      %s1849 = sadd.s32 %s1847, %s1848
      %s1850 = scalar_lea.vmem %s4, %s1849
      %p1851 = scmp.lt.s32.totalorder %s21, 1
      %s1852 = scalar_select %p1851, %s21, 1
      %p1853 = scmp.lt.s32.totalorder %s22, 1
      %s1854 = scalar_select %p1853, %s22, 1
      %s1855 = smul.addr %s1852, 2
      %s1856 = sadd.s32 %s1854, %s1855
      %s1857 = scalar_lea.vmem %s5, %s1856
      // Predicated region
      $region33: #{double_conv.4} parent=31 // pred_check
        %p1858 = pneg %p126
      $region34: #{double_conv.4} parent=31 // pred_check_branch
        %1860 = sbr.rel (%p1858) target = $region36
      $region35: #{double_conv.4} parent=31 // pred_region
        %s1861 = smul.u32 8, %s22
      $region36: #{double_conv.4} parent=31 // pred_fallthru
        _
      // Predicated region
      $region37: #{double_conv.4} parent=31 // pred_check
        %p1862 = pneg %p154
      $region38: #{double_conv.4} parent=31 // pred_check_branch
        %1864 = sbr.rel (%p1862) target = $region40
      $region39: #{double_conv.4} parent=31 // pred_region
        _
      $region40: #{double_conv.4} parent=31 // pred_fallthru
        _
      // Predicated region
      $region41: #{double_conv.4} parent=31 // pred_check
        %p1865 = pneg %p182
      $region42: #{double_conv.4} parent=31 // pred_check_branch
        %1867 = sbr.rel (%p1865) target = $region44
      $region43: #{double_conv.4} parent=31 // pred_region
        _
      $region44: #{double_conv.4} parent=31 // pred_fallthru
        _
    $region32: #{double_conv.4} parent=5 // pred_fallthru
      _
    %p1868 = scmp.le.s32.totalorder 2, %s12
    // Predicated region
    $region45: #{double_conv.4} parent=5 // pred_check
      %p1869 = pneg %p1868
    $region46: #{double_conv.4} parent=5 // pred_check_branch
      %1871 = sbr.rel (%p1869) target = $region48
    $region47: #{double_conv.4} parent=5 // pred_region
      %s1872 = ssub.s32 %s12, 2
      // Predicated region
      $region49: #{double_conv.4} parent=47 // pred_check
        %p1873 = pneg %p132
      $region50: #{double_conv.4} parent=47 // pred_check_branch
        %1875 = sbr.rel (%p1873) target = $region52
      $region51: #{double_conv.4} parent=47 // pred_region
        %s1876 = smul.u32 8, %s24
        %p1877 = scmp.lt.s32.totalorder %s23, 1
        %s1878 = scalar_select %p1877, %s23, 1
        %p1879 = scmp.lt.s32.totalorder %s1876, 15
        %s1880 = scalar_select %p1879, %s1876, 15
        %s1881 = smul.addr %s1880, 2
        %s1882 = smul.addr %s1878, 32
        %s1883 = sadd.s32 %s1881, %s1882
        %s1884 = smul.addr %s1883, 4
        %s1885 = scalar_lea.vmem %s3, %s1884
      $region52: #{double_conv.4} parent=47 // pred_fallthru
        _
      // Predicated region
      $region53: #{double_conv.4} parent=47 // pred_check
        %p1886 = pneg %p160
      $region54: #{double_conv.4} parent=47 // pred_check_branch
        %1888 = sbr.rel (%p1886) target = $region56
      $region55: #{double_conv.4} parent=47 // pred_region
        %p1889 = scmp.lt.s32.totalorder %s23, 1
        %s1890 = scalar_select %p1889, %s23, 1
        %p1891 = scmp.lt.s32.totalorder %s24, 1
        %s1892 = scalar_select %p1891, %s24, 1
        %s1893 = smul.addr %s1890, 2
        %s1894 = sadd.s32 %s1892, %s1893
        %s1895 = scalar_lea.vmem %s4, %s1894
      $region56: #{double_conv.4} parent=47 // pred_fallthru
        _
      // Predicated region
      $region57: #{double_conv.4} parent=47 // pred_check
        %p1896 = pneg %p188
      $region58: #{double_conv.4} parent=47 // pred_check_branch
        %1898 = sbr.rel (%p1896) target = $region60
      $region59: #{double_conv.4} parent=47 // pred_region
        %p1899 = scmp.lt.s32.totalorder %s23, 1
        %s1900 = scalar_select %p1899, %s23, 1
        %p1901 = scmp.lt.s32.totalorder %s24, 1
        %s1902 = scalar_select %p1901, %s24, 1
        %s1903 = smul.addr %s1900, 2
        %s1904 = sadd.s32 %s1902, %s1903
        %s1905 = scalar_lea.vmem %s5, %s1904
      $region60: #{double_conv.4} parent=47 // pred_fallthru
        _
    $region48: #{double_conv.4} parent=5 // pred_fallthru
      _
  $region6: #{double_conv.4} parent=0 // loop_footer
    %s16 = sadd.s32 1, %s12
  $region7: #{double_conv.4} parent=0 // loop_footer_branch
    %11 = sbr.rel target = $region3
  $region8: #{double_conv.4} parent=0 // loop_exit
    _

</llo_original>
